<compile_context>
chip_gen: v7x
topology: tpu7x:2x2x1
jax: 0.10.0
libtpu: 0.0.40
codegen_flags: <defaults>
</compile_context>

<pallas_src>
import jax
import jax.numpy as jnp
import numpy as np
from jax.experimental import pallas as pl
from jax.experimental.pallas import tpu as pltpu

N = 8        # square size consistent with the forward's shape requirements
STEPS = 100  # iteration count hard-coded in the original module


def _mm_vpu(x, y):
    """(n,n) @ (n,n) as n rank-1 broadcast products on the VPU, tree-summed.

    x[:, k:k+1] lane-broadcasts a column, y[k:k+1, :] sublane-broadcasts a row;
    products/adds are plain f32 VALU ops (no MXU, no bf16 operand truncation).
    """
    n = x.shape[0]
    terms = [x[:, k:k + 1] * y[k:k + 1, :] for k in range(n)]
    while len(terms) > 1:                      # balanced tree: add depth log2(n)
        nxt = [terms[i] + terms[i + 1] for i in range(0, len(terms) - 1, 2)]
        if len(terms) % 2:
            nxt.append(terms[-1])
        terms = nxt
    return terms[0]


def model_kernel(t1_ref, t2_ref, out_ref):
    """Whole forward pass in one straight-line kernel (values stay in vregs).

    One pair of original iterations is the affine map F(X) = C + A X A with
    A = t2 and C = t1 + t1 @ t2.  Represent F^m(X) = S_m + P_m X P_m (P_m = A^m)
    and use F^(a+b) = F^a ∘ F^b  =>  S = S_a + P_a S_b P_a,  P = P_a P_b.
    100 original iterations = F^50 applied to t1; output = F^50(t1) + t1.
    """
    t1 = t1_ref[...]
    a = t2_ref[...]

    # Loop-invariant affine constant (folds the intermediate '+ t1').
    c = t1 + _mm_vpu(t1, a)

    def compose(sa, pa, sb, pb):
        # F^a ∘ F^b : (S, P) -> (S_a + P_a S_b P_a, P_a P_b)
        return sa + _mm_vpu(pa, _mm_vpu(sb, pa)), _mm_vpu(pa, pb)

    s1, p1 = c, a                            # F^1
    s2, p2 = compose(s1, p1, s1, p1)         # F^2
    s4, p4 = compose(s2, p2, s2, p2)         # F^4
    s8, p8 = compose(s4, p4, s4, p4)         # F^8
    s16, p16 = compose(s8, p8, s8, p8)       # F^16
    s32, p32 = compose(s16, p16, s16, p16)   # F^32
    s18, p18 = compose(s16, p16, s2, p2)     # F^18
    s50, p50 = compose(s32, p32, s18, p18)   # F^50   (50 = 32 + 16 + 2)

    t3 = s50 + _mm_vpu(p50, _mm_vpu(t1, p50))  # F^50(t1)
    out_ref[...] = t3 + t1                     # single output store


@jax.jit
def model_forward(input1, input2):
    n, m = input1.shape
    assert n == m and input2.shape == (n, m), (
        "forward's matmul chain requires square, equal-shaped inputs")
    # ~1 KiB working set, strictly serial recurrence: no grid, no scratch,
    # whole arrays VMEM-resident for the single kernel invocation.
    return pl.pallas_call(
        model_kernel,
        out_shape=jax.ShapeDtypeStruct((n, m), jnp.float32),
        in_specs=[
            pl.BlockSpec(memory_space=pltpu.MemorySpace.VMEM),
            pl.BlockSpec(memory_space=pltpu.MemorySpace.VMEM),
        ],
        out_specs=pl.BlockSpec(memory_space=pltpu.MemorySpace.VMEM),
    )(input1, input2)


def reference_forward(input1, input2):
    # Exact-f32 numpy reference of the PyTorch forward (independent of TPU
    # matmul precision defaults).
    t1 = np.asarray(jax.device_get(input1), dtype=np.float32)
    t2 = np.asarray(jax.device_get(input2), dtype=np.float32)
    t3 = t1
    for i in range(STEPS):
        if i % 2 == 0:
            t3 = t1 + t2 @ t3
        else:
            t3 = t1 + t3 @ t2
    return t3 + t1


if __name__ == "__main__":
    key = jax.random.PRNGKey(0)
    k1, k2 = jax.random.split(key)
    # Scale down so the 100-step recurrence stays numerically bounded
    # (contraction makes the affine map well-conditioned).
    input1 = (0.1 * jax.random.normal(k1, (N, N))).astype(jnp.float32)
    input2 = (0.1 * jax.random.normal(k2, (N, N))).astype(jnp.float32)

    out = model_forward(input1, input2)
    jax.block_until_ready(out)

    ref = reference_forward(input1, input2)
    assert out.shape == (N, N)
    assert np.allclose(np.asarray(jax.device_get(out)), ref, atol=1e-4, rtol=1e-4)
    print("KERNEL_OK")
</pallas_src>

<mosaic_0001>
module attributes {stable_mosaic.version = 11 : i64} {
  func.func @model_kernel(%arg0: memref<8x8xf32, #tpu.memory_space<vmem>>, %arg1: memref<8x8xf32, #tpu.memory_space<vmem>>, %arg2: memref<8x8xf32, #tpu.memory_space<vmem>>) attributes {dimension_semantics = [], scalar_prefetch = 0 : i64, scratch_operands = 0 : i64, tpu.core_type = #tpu.core_type<tc>} {
    %c0 = arith.constant 0 : index
    %c0_0 = arith.constant 0 : index
    %0 = vector.load %arg0[%c0, %c0_0] : memref<8x8xf32, #tpu.memory_space<vmem>>, vector<8x8xf32>
    %c0_1 = arith.constant 0 : index
    %c0_2 = arith.constant 0 : index
    %1 = vector.load %arg1[%c0_1, %c0_2] : memref<8x8xf32, #tpu.memory_space<vmem>>, vector<8x8xf32>
    %2 = vector.extract_strided_slice %0 {offsets = [0, 0], sizes = [8, 1], strides = [1, 1]} : vector<8x8xf32> to vector<8x1xf32>
    %3 = vector.extract_strided_slice %1 {offsets = [0, 0], sizes = [1, 8], strides = [1, 1]} : vector<8x8xf32> to vector<1x8xf32>
    %4 = vector.broadcast %2 : vector<8x1xf32> to vector<8x8xf32>
    %5 = vector.broadcast %3 : vector<1x8xf32> to vector<8x8xf32>
    %6 = arith.mulf %4, %5 : vector<8x8xf32>
    %7 = vector.extract_strided_slice %0 {offsets = [0, 1], sizes = [8, 1], strides = [1, 1]} : vector<8x8xf32> to vector<8x1xf32>
    %8 = vector.extract_strided_slice %1 {offsets = [1, 0], sizes = [1, 8], strides = [1, 1]} : vector<8x8xf32> to vector<1x8xf32>
    %9 = vector.broadcast %7 : vector<8x1xf32> to vector<8x8xf32>
    %10 = vector.broadcast %8 : vector<1x8xf32> to vector<8x8xf32>
    %11 = arith.mulf %9, %10 : vector<8x8xf32>
    %12 = vector.extract_strided_slice %0 {offsets = [0, 2], sizes = [8, 1], strides = [1, 1]} : vector<8x8xf32> to vector<8x1xf32>
    %13 = vector.extract_strided_slice %1 {offsets = [2, 0], sizes = [1, 8], strides = [1, 1]} : vector<8x8xf32> to vector<1x8xf32>
    %14 = vector.broadcast %12 : vector<8x1xf32> to vector<8x8xf32>
    %15 = vector.broadcast %13 : vector<1x8xf32> to vector<8x8xf32>
    %16 = arith.mulf %14, %15 : vector<8x8xf32>
    %17 = vector.extract_strided_slice %0 {offsets = [0, 3], sizes = [8, 1], strides = [1, 1]} : vector<8x8xf32> to vector<8x1xf32>
    %18 = vector.extract_strided_slice %1 {offsets = [3, 0], sizes = [1, 8], strides = [1, 1]} : vector<8x8xf32> to vector<1x8xf32>
    %19 = vector.broadcast %17 : vector<8x1xf32> to vector<8x8xf32>
    %20 = vector.broadcast %18 : vector<1x8xf32> to vector<8x8xf32>
    %21 = arith.mulf %19, %20 : vector<8x8xf32>
    %22 = vector.extract_strided_slice %0 {offsets = [0, 4], sizes = [8, 1], strides = [1, 1]} : vector<8x8xf32> to vector<8x1xf32>
    %23 = vector.extract_strided_slice %1 {offsets = [4, 0], sizes = [1, 8], strides = [1, 1]} : vector<8x8xf32> to vector<1x8xf32>
    %24 = vector.broadcast %22 : vector<8x1xf32> to vector<8x8xf32>
    %25 = vector.broadcast %23 : vector<1x8xf32> to vector<8x8xf32>
    %26 = arith.mulf %24, %25 : vector<8x8xf32>
    %27 = vector.extract_strided_slice %0 {offsets = [0, 5], sizes = [8, 1], strides = [1, 1]} : vector<8x8xf32> to vector<8x1xf32>
    %28 = vector.extract_strided_slice %1 {offsets = [5, 0], sizes = [1, 8], strides = [1, 1]} : vector<8x8xf32> to vector<1x8xf32>
    %29 = vector.broadcast %27 : vector<8x1xf32> to vector<8x8xf32>
    %30 = vector.broadcast %28 : vector<1x8xf32> to vector<8x8xf32>
    %31 = arith.mulf %29, %30 : vector<8x8xf32>
    %32 = vector.extract_strided_slice %0 {offsets = [0, 6], sizes = [8, 1], strides = [1, 1]} : vector<8x8xf32> to vector<8x1xf32>
    %33 = vector.extract_strided_slice %1 {offsets = [6, 0], sizes = [1, 8], strides = [1, 1]} : vector<8x8xf32> to vector<1x8xf32>
    %34 = vector.broadcast %32 : vector<8x1xf32> to vector<8x8xf32>
    %35 = vector.broadcast %33 : vector<1x8xf32> to vector<8x8xf32>
    %36 = arith.mulf %34, %35 : vector<8x8xf32>
    %37 = vector.extract_strided_slice %0 {offsets = [0, 7], sizes = [8, 1], strides = [1, 1]} : vector<8x8xf32> to vector<8x1xf32>
    %38 = vector.extract_strided_slice %1 {offsets = [7, 0], sizes = [1, 8], strides = [1, 1]} : vector<8x8xf32> to vector<1x8xf32>
    %39 = vector.broadcast %37 : vector<8x1xf32> to vector<8x8xf32>
    %40 = vector.broadcast %38 : vector<1x8xf32> to vector<8x8xf32>
    %41 = arith.mulf %39, %40 : vector<8x8xf32>
    %42 = arith.addf %6, %11 : vector<8x8xf32>
    %43 = arith.addf %16, %21 : vector<8x8xf32>
    %44 = arith.addf %26, %31 : vector<8x8xf32>
    %45 = arith.addf %36, %41 : vector<8x8xf32>
    %46 = arith.addf %42, %43 : vector<8x8xf32>
    %47 = arith.addf %44, %45 : vector<8x8xf32>
    %48 = arith.addf %46, %47 : vector<8x8xf32>
    %49 = arith.addf %0, %48 : vector<8x8xf32>
    %50 = vector.extract_strided_slice %49 {offsets = [0, 0], sizes = [8, 1], strides = [1, 1]} : vector<8x8xf32> to vector<8x1xf32>
    %51 = vector.extract_strided_slice %1 {offsets = [0, 0], sizes = [1, 8], strides = [1, 1]} : vector<8x8xf32> to vector<1x8xf32>
    %52 = vector.broadcast %50 : vector<8x1xf32> to vector<8x8xf32>
    %53 = vector.broadcast %51 : vector<1x8xf32> to vector<8x8xf32>
    %54 = arith.mulf %52, %53 : vector<8x8xf32>
    %55 = vector.extract_strided_slice %49 {offsets = [0, 1], sizes = [8, 1], strides = [1, 1]} : vector<8x8xf32> to vector<8x1xf32>
    %56 = vector.extract_strided_slice %1 {offsets = [1, 0], sizes = [1, 8], strides = [1, 1]} : vector<8x8xf32> to vector<1x8xf32>
    %57 = vector.broadcast %55 : vector<8x1xf32> to vector<8x8xf32>
    %58 = vector.broadcast %56 : vector<1x8xf32> to vector<8x8xf32>
    %59 = arith.mulf %57, %58 : vector<8x8xf32>
    %60 = vector.extract_strided_slice %49 {offsets = [0, 2], sizes = [8, 1], strides = [1, 1]} : vector<8x8xf32> to vector<8x1xf32>
    %61 = vector.extract_strided_slice %1 {offsets = [2, 0], sizes = [1, 8], strides = [1, 1]} : vector<8x8xf32> to vector<1x8xf32>
    %62 = vector.broadcast %60 : vector<8x1xf32> to vector<8x8xf32>
    %63 = vector.broadcast %61 : vector<1x8xf32> to vector<8x8xf32>
    %64 = arith.mulf %62, %63 : vector<8x8xf32>
    %65 = vector.extract_strided_slice %49 {offsets = [0, 3], sizes = [8, 1], strides = [1, 1]} : vector<8x8xf32> to vector<8x1xf32>
    %66 = vector.extract_strided_slice %1 {offsets = [3, 0], sizes = [1, 8], strides = [1, 1]} : vector<8x8xf32> to vector<1x8xf32>
    %67 = vector.broadcast %65 : vector<8x1xf32> to vector<8x8xf32>
    %68 = vector.broadcast %66 : vector<1x8xf32> to vector<8x8xf32>
    %69 = arith.mulf %67, %68 : vector<8x8xf32>
    %70 = vector.extract_strided_slice %49 {offsets = [0, 4], sizes = [8, 1], strides = [1, 1]} : vector<8x8xf32> to vector<8x1xf32>
    %71 = vector.extract_strided_slice %1 {offsets = [4, 0], sizes = [1, 8], strides = [1, 1]} : vector<8x8xf32> to vector<1x8xf32>
    %72 = vector.broadcast %70 : vector<8x1xf32> to vector<8x8xf32>
    %73 = vector.broadcast %71 : vector<1x8xf32> to vector<8x8xf32>
    %74 = arith.mulf %72, %73 : vector<8x8xf32>
    %75 = vector.extract_strided_slice %49 {offsets = [0, 5], sizes = [8, 1], strides = [1, 1]} : vector<8x8xf32> to vector<8x1xf32>
    %76 = vector.extract_strided_slice %1 {offsets = [5, 0], sizes = [1, 8], strides = [1, 1]} : vector<8x8xf32> to vector<1x8xf32>
    %77 = vector.broadcast %75 : vector<8x1xf32> to vector<8x8xf32>
    %78 = vector.broadcast %76 : vector<1x8xf32> to vector<8x8xf32>
    %79 = arith.mulf %77, %78 : vector<8x8xf32>
    %80 = vector.extract_strided_slice %49 {offsets = [0, 6], sizes = [8, 1], strides = [1, 1]} : vector<8x8xf32> to vector<8x1xf32>
    %81 = vector.extract_strided_slice %1 {offsets = [6, 0], sizes = [1, 8], strides = [1, 1]} : vector<8x8xf32> to vector<1x8xf32>
    %82 = vector.broadcast %80 : vector<8x1xf32> to vector<8x8xf32>
    %83 = vector.broadcast %81 : vector<1x8xf32> to vector<8x8xf32>
    %84 = arith.mulf %82, %83 : vector<8x8xf32>
    %85 = vector.extract_strided_slice %49 {offsets = [0, 7], sizes = [8, 1], strides = [1, 1]} : vector<8x8xf32> to vector<8x1xf32>
    %86 = vector.extract_strided_slice %1 {offsets = [7, 0], sizes = [1, 8], strides = [1, 1]} : vector<8x8xf32> to vector<1x8xf32>
    %87 = vector.broadcast %85 : vector<8x1xf32> to vector<8x8xf32>
    %88 = vector.broadcast %86 : vector<1x8xf32> to vector<8x8xf32>
    %89 = arith.mulf %87, %88 : vector<8x8xf32>
    %90 = arith.addf %54, %59 : vector<8x8xf32>
    %91 = arith.addf %64, %69 : vector<8x8xf32>
    %92 = arith.addf %74, %79 : vector<8x8xf32>
    %93 = arith.addf %84, %89 : vector<8x8xf32>
    %94 = arith.addf %90, %91 : vector<8x8xf32>
    %95 = arith.addf %92, %93 : vector<8x8xf32>
    %96 = arith.addf %94, %95 : vector<8x8xf32>
    %97 = vector.extract_strided_slice %1 {offsets = [0, 0], sizes = [8, 1], strides = [1, 1]} : vector<8x8xf32> to vector<8x1xf32>
    %98 = vector.extract_strided_slice %96 {offsets = [0, 0], sizes = [1, 8], strides = [1, 1]} : vector<8x8xf32> to vector<1x8xf32>
    %99 = vector.broadcast %97 : vector<8x1xf32> to vector<8x8xf32>
    %100 = vector.broadcast %98 : vector<1x8xf32> to vector<8x8xf32>
    %101 = arith.mulf %99, %100 : vector<8x8xf32>
    %102 = vector.extract_strided_slice %1 {offsets = [0, 1], sizes = [8, 1], strides = [1, 1]} : vector<8x8xf32> to vector<8x1xf32>
    %103 = vector.extract_strided_slice %96 {offsets = [1, 0], sizes = [1, 8], strides = [1, 1]} : vector<8x8xf32> to vector<1x8xf32>
    %104 = vector.broadcast %102 : vector<8x1xf32> to vector<8x8xf32>
    %105 = vector.broadcast %103 : vector<1x8xf32> to vector<8x8xf32>
    %106 = arith.mulf %104, %105 : vector<8x8xf32>
    %107 = vector.extract_strided_slice %1 {offsets = [0, 2], sizes = [8, 1], strides = [1, 1]} : vector<8x8xf32> to vector<8x1xf32>
    %108 = vector.extract_strided_slice %96 {offsets = [2, 0], sizes = [1, 8], strides = [1, 1]} : vector<8x8xf32> to vector<1x8xf32>
    %109 = vector.broadcast %107 : vector<8x1xf32> to vector<8x8xf32>
    %110 = vector.broadcast %108 : vector<1x8xf32> to vector<8x8xf32>
    %111 = arith.mulf %109, %110 : vector<8x8xf32>
    %112 = vector.extract_strided_slice %1 {offsets = [0, 3], sizes = [8, 1], strides = [1, 1]} : vector<8x8xf32> to vector<8x1xf32>
    %113 = vector.extract_strided_slice %96 {offsets = [3, 0], sizes = [1, 8], strides = [1, 1]} : vector<8x8xf32> to vector<1x8xf32>
    %114 = vector.broadcast %112 : vector<8x1xf32> to vector<8x8xf32>
    %115 = vector.broadcast %113 : vector<1x8xf32> to vector<8x8xf32>
    %116 = arith.mulf %114, %115 : vector<8x8xf32>
    %117 = vector.extract_strided_slice %1 {offsets = [0, 4], sizes = [8, 1], strides = [1, 1]} : vector<8x8xf32> to vector<8x1xf32>
    %118 = vector.extract_strided_slice %96 {offsets = [4, 0], sizes = [1, 8], strides = [1, 1]} : vector<8x8xf32> to vector<1x8xf32>
    %119 = vector.broadcast %117 : vector<8x1xf32> to vector<8x8xf32>
    %120 = vector.broadcast %118 : vector<1x8xf32> to vector<8x8xf32>
    %121 = arith.mulf %119, %120 : vector<8x8xf32>
    %122 = vector.extract_strided_slice %1 {offsets = [0, 5], sizes = [8, 1], strides = [1, 1]} : vector<8x8xf32> to vector<8x1xf32>
    %123 = vector.extract_strided_slice %96 {offsets = [5, 0], sizes = [1, 8], strides = [1, 1]} : vector<8x8xf32> to vector<1x8xf32>
    %124 = vector.broadcast %122 : vector<8x1xf32> to vector<8x8xf32>
    %125 = vector.broadcast %123 : vector<1x8xf32> to vector<8x8xf32>
    %126 = arith.mulf %124, %125 : vector<8x8xf32>
    %127 = vector.extract_strided_slice %1 {offsets = [0, 6], sizes = [8, 1], strides = [1, 1]} : vector<8x8xf32> to vector<8x1xf32>
    %128 = vector.extract_strided_slice %96 {offsets = [6, 0], sizes = [1, 8], strides = [1, 1]} : vector<8x8xf32> to vector<1x8xf32>
    %129 = vector.broadcast %127 : vector<8x1xf32> to vector<8x8xf32>
    %130 = vector.broadcast %128 : vector<1x8xf32> to vector<8x8xf32>
    %131 = arith.mulf %129, %130 : vector<8x8xf32>
    %132 = vector.extract_strided_slice %1 {offsets = [0, 7], sizes = [8, 1], strides = [1, 1]} : vector<8x8xf32> to vector<8x1xf32>
    %133 = vector.extract_strided_slice %96 {offsets = [7, 0], sizes = [1, 8], strides = [1, 1]} : vector<8x8xf32> to vector<1x8xf32>
    %134 = vector.broadcast %132 : vector<8x1xf32> to vector<8x8xf32>
    %135 = vector.broadcast %133 : vector<1x8xf32> to vector<8x8xf32>
    %136 = arith.mulf %134, %135 : vector<8x8xf32>
    %137 = arith.addf %101, %106 : vector<8x8xf32>
    %138 = arith.addf %111, %116 : vector<8x8xf32>
    %139 = arith.addf %121, %126 : vector<8x8xf32>
    %140 = arith.addf %131, %136 : vector<8x8xf32>
    %141 = arith.addf %137, %138 : vector<8x8xf32>
    %142 = arith.addf %139, %140 : vector<8x8xf32>
    %143 = arith.addf %141, %142 : vector<8x8xf32>
    %144 = arith.addf %49, %143 : vector<8x8xf32>
    %145 = vector.extract_strided_slice %1 {offsets = [0, 0], sizes = [8, 1], strides = [1, 1]} : vector<8x8xf32> to vector<8x1xf32>
    %146 = vector.extract_strided_slice %1 {offsets = [0, 0], sizes = [1, 8], strides = [1, 1]} : vector<8x8xf32> to vector<1x8xf32>
    %147 = vector.broadcast %145 : vector<8x1xf32> to vector<8x8xf32>
    %148 = vector.broadcast %146 : vector<1x8xf32> to vector<8x8xf32>
    %149 = arith.mulf %147, %148 : vector<8x8xf32>
    %150 = vector.extract_strided_slice %1 {offsets = [0, 1], sizes = [8, 1], strides = [1, 1]} : vector<8x8xf32> to vector<8x1xf32>
    %151 = vector.extract_strided_slice %1 {offsets = [1, 0], sizes = [1, 8], strides = [1, 1]} : vector<8x8xf32> to vector<1x8xf32>
    %152 = vector.broadcast %150 : vector<8x1xf32> to vector<8x8xf32>
    %153 = vector.broadcast %151 : vector<1x8xf32> to vector<8x8xf32>
    %154 = arith.mulf %152, %153 : vector<8x8xf32>
    %155 = vector.extract_strided_slice %1 {offsets = [0, 2], sizes = [8, 1], strides = [1, 1]} : vector<8x8xf32> to vector<8x1xf32>
    %156 = vector.extract_strided_slice %1 {offsets = [2, 0], sizes = [1, 8], strides = [1, 1]} : vector<8x8xf32> to vector<1x8xf32>
    %157 = vector.broadcast %155 : vector<8x1xf32> to vector<8x8xf32>
    %158 = vector.broadcast %156 : vector<1x8xf32> to vector<8x8xf32>
    %159 = arith.mulf %157, %158 : vector<8x8xf32>
    %160 = vector.extract_strided_slice %1 {offsets = [0, 3], sizes = [8, 1], strides = [1, 1]} : vector<8x8xf32> to vector<8x1xf32>
    %161 = vector.extract_strided_slice %1 {offsets = [3, 0], sizes = [1, 8], strides = [1, 1]} : vector<8x8xf32> to vector<1x8xf32>
    %162 = vector.broadcast %160 : vector<8x1xf32> to vector<8x8xf32>
    %163 = vector.broadcast %161 : vector<1x8xf32> to vector<8x8xf32>
    %164 = arith.mulf %162, %163 : vector<8x8xf32>
    %165 = vector.extract_strided_slice %1 {offsets = [0, 4], sizes = [8, 1], strides = [1, 1]} : vector<8x8xf32> to vector<8x1xf32>
    %166 = vector.extract_strided_slice %1 {offsets = [4, 0], sizes = [1, 8], strides = [1, 1]} : vector<8x8xf32> to vector<1x8xf32>
    %167 = vector.broadcast %165 : vector<8x1xf32> to vector<8x8xf32>
    %168 = vector.broadcast %166 : vector<1x8xf32> to vector<8x8xf32>
    %169 = arith.mulf %167, %168 : vector<8x8xf32>
    %170 = vector.extract_strided_slice %1 {offsets = [0, 5], sizes = [8, 1], strides = [1, 1]} : vector<8x8xf32> to vector<8x1xf32>
    %171 = vector.extract_strided_slice %1 {offsets = [5, 0], sizes = [1, 8], strides = [1, 1]} : vector<8x8xf32> to vector<1x8xf32>
    %172 = vector.broadcast %170 : vector<8x1xf32> to vector<8x8xf32>
    %173 = vector.broadcast %171 : vector<1x8xf32> to vector<8x8xf32>
    %174 = arith.mulf %172, %173 : vector<8x8xf32>
    %175 = vector.extract_strided_slice %1 {offsets = [0, 6], sizes = [8, 1], strides = [1, 1]} : vector<8x8xf32> to vector<8x1xf32>
    %176 = vector.extract_strided_slice %1 {offsets = [6, 0], sizes = [1, 8], strides = [1, 1]} : vector<8x8xf32> to vector<1x8xf32>
    %177 = vector.broadcast %175 : vector<8x1xf32> to vector<8x8xf32>
    %178 = vector.broadcast %176 : vector<1x8xf32> to vector<8x8xf32>
    %179 = arith.mulf %177, %178 : vector<8x8xf32>
    %180 = vector.extract_strided_slice %1 {offsets = [0, 7], sizes = [8, 1], strides = [1, 1]} : vector<8x8xf32> to vector<8x1xf32>
    %181 = vector.extract_strided_slice %1 {offsets = [7, 0], sizes = [1, 8], strides = [1, 1]} : vector<8x8xf32> to vector<1x8xf32>
    %182 = vector.broadcast %180 : vector<8x1xf32> to vector<8x8xf32>
    %183 = vector.broadcast %181 : vector<1x8xf32> to vector<8x8xf32>
    %184 = arith.mulf %182, %183 : vector<8x8xf32>
    %185 = arith.addf %149, %154 : vector<8x8xf32>
    %186 = arith.addf %159, %164 : vector<8x8xf32>
    %187 = arith.addf %169, %174 : vector<8x8xf32>
    %188 = arith.addf %179, %184 : vector<8x8xf32>
    %189 = arith.addf %185, %186 : vector<8x8xf32>
    %190 = arith.addf %187, %188 : vector<8x8xf32>
    %191 = arith.addf %189, %190 : vector<8x8xf32>
    %192 = vector.extract_strided_slice %144 {offsets = [0, 0], sizes = [8, 1], strides = [1, 1]} : vector<8x8xf32> to vector<8x1xf32>
    %193 = vector.extract_strided_slice %191 {offsets = [0, 0], sizes = [1, 8], strides = [1, 1]} : vector<8x8xf32> to vector<1x8xf32>
    %194 = vector.broadcast %192 : vector<8x1xf32> to vector<8x8xf32>
    %195 = vector.broadcast %193 : vector<1x8xf32> to vector<8x8xf32>
    %196 = arith.mulf %194, %195 : vector<8x8xf32>
    %197 = vector.extract_strided_slice %144 {offsets = [0, 1], sizes = [8, 1], strides = [1, 1]} : vector<8x8xf32> to vector<8x1xf32>
    %198 = vector.extract_strided_slice %191 {offsets = [1, 0], sizes = [1, 8], strides = [1, 1]} : vector<8x8xf32> to vector<1x8xf32>
    %199 = vector.broadcast %197 : vector<8x1xf32> to vector<8x8xf32>
    %200 = vector.broadcast %198 : vector<1x8xf32> to vector<8x8xf32>
    %201 = arith.mulf %199, %200 : vector<8x8xf32>
    %202 = vector.extract_strided_slice %144 {offsets = [0, 2], sizes = [8, 1], strides = [1, 1]} : vector<8x8xf32> to vector<8x1xf32>
    %203 = vector.extract_strided_slice %191 {offsets = [2, 0], sizes = [1, 8], strides = [1, 1]} : vector<8x8xf32> to vector<1x8xf32>
    %204 = vector.broadcast %202 : vector<8x1xf32> to vector<8x8xf32>
    %205 = vector.broadcast %203 : vector<1x8xf32> to vector<8x8xf32>
    %206 = arith.mulf %204, %205 : vector<8x8xf32>
    %207 = vector.extract_strided_slice %144 {offsets = [0, 3], sizes = [8, 1], strides = [1, 1]} : vector<8x8xf32> to vector<8x1xf32>
    %208 = vector.extract_strided_slice %191 {offsets = [3, 0], sizes = [1, 8], strides = [1, 1]} : vector<8x8xf32> to vector<1x8xf32>
    %209 = vector.broadcast %207 : vector<8x1xf32> to vector<8x8xf32>
    %210 = vector.broadcast %208 : vector<1x8xf32> to vector<8x8xf32>
    %211 = arith.mulf %209, %210 : vector<8x8xf32>
    %212 = vector.extract_strided_slice %144 {offsets = [0, 4], sizes = [8, 1], strides = [1, 1]} : vector<8x8xf32> to vector<8x1xf32>
    %213 = vector.extract_strided_slice %191 {offsets = [4, 0], sizes = [1, 8], strides = [1, 1]} : vector<8x8xf32> to vector<1x8xf32>
    %214 = vector.broadcast %212 : vector<8x1xf32> to vector<8x8xf32>
    %215 = vector.broadcast %213 : vector<1x8xf32> to vector<8x8xf32>
    %216 = arith.mulf %214, %215 : vector<8x8xf32>
    %217 = vector.extract_strided_slice %144 {offsets = [0, 5], sizes = [8, 1], strides = [1, 1]} : vector<8x8xf32> to vector<8x1xf32>
    %218 = vector.extract_strided_slice %191 {offsets = [5, 0], sizes = [1, 8], strides = [1, 1]} : vector<8x8xf32> to vector<1x8xf32>
    %219 = vector.broadcast %217 : vector<8x1xf32> to vector<8x8xf32>
    %220 = vector.broadcast %218 : vector<1x8xf32> to vector<8x8xf32>
    %221 = arith.mulf %219, %220 : vector<8x8xf32>
    %222 = vector.extract_strided_slice %144 {offsets = [0, 6], sizes = [8, 1], strides = [1, 1]} : vector<8x8xf32> to vector<8x1xf32>
    %223 = vector.extract_strided_slice %191 {offsets = [6, 0], sizes = [1, 8], strides = [1, 1]} : vector<8x8xf32> to vector<1x8xf32>
    %224 = vector.broadcast %222 : vector<8x1xf32> to vector<8x8xf32>
    %225 = vector.broadcast %223 : vector<1x8xf32> to vector<8x8xf32>
    %226 = arith.mulf %224, %225 : vector<8x8xf32>
    %227 = vector.extract_strided_slice %144 {offsets = [0, 7], sizes = [8, 1], strides = [1, 1]} : vector<8x8xf32> to vector<8x1xf32>
    %228 = vector.extract_strided_slice %191 {offsets = [7, 0], sizes = [1, 8], strides = [1, 1]} : vector<8x8xf32> to vector<1x8xf32>
    %229 = vector.broadcast %227 : vector<8x1xf32> to vector<8x8xf32>
    %230 = vector.broadcast %228 : vector<1x8xf32> to vector<8x8xf32>
    %231 = arith.mulf %229, %230 : vector<8x8xf32>
    %232 = arith.addf %196, %201 : vector<8x8xf32>
    %233 = arith.addf %206, %211 : vector<8x8xf32>
    %234 = arith.addf %216, %221 : vector<8x8xf32>
    %235 = arith.addf %226, %231 : vector<8x8xf32>
    %236 = arith.addf %232, %233 : vector<8x8xf32>
    %237 = arith.addf %234, %235 : vector<8x8xf32>
    %238 = arith.addf %236, %237 : vector<8x8xf32>
    %239 = vector.extract_strided_slice %191 {offsets = [0, 0], sizes = [8, 1], strides = [1, 1]} : vector<8x8xf32> to vector<8x1xf32>
    %240 = vector.extract_strided_slice %238 {offsets = [0, 0], sizes = [1, 8], strides = [1, 1]} : vector<8x8xf32> to vector<1x8xf32>
    %241 = vector.broadcast %239 : vector<8x1xf32> to vector<8x8xf32>
    %242 = vector.broadcast %240 : vector<1x8xf32> to vector<8x8xf32>
    %243 = arith.mulf %241, %242 : vector<8x8xf32>
    %244 = vector.extract_strided_slice %191 {offsets = [0, 1], sizes = [8, 1], strides = [1, 1]} : vector<8x8xf32> to vector<8x1xf32>
    %245 = vector.extract_strided_slice %238 {offsets = [1, 0], sizes = [1, 8], strides = [1, 1]} : vector<8x8xf32> to vector<1x8xf32>
    %246 = vector.broadcast %244 : vector<8x1xf32> to vector<8x8xf32>
    %247 = vector.broadcast %245 : vector<1x8xf32> to vector<8x8xf32>
    %248 = arith.mulf %246, %247 : vector<8x8xf32>
    %249 = vector.extract_strided_slice %191 {offsets = [0, 2], sizes = [8, 1], strides = [1, 1]} : vector<8x8xf32> to vector<8x1xf32>
    %250 = vector.extract_strided_slice %238 {offsets = [2, 0], sizes = [1, 8], strides = [1, 1]} : vector<8x8xf32> to vector<1x8xf32>
    %251 = vector.broadcast %249 : vector<8x1xf32> to vector<8x8xf32>
    %252 = vector.broadcast %250 : vector<1x8xf32> to vector<8x8xf32>
    %253 = arith.mulf %251, %252 : vector<8x8xf32>
    %254 = vector.extract_strided_slice %191 {offsets = [0, 3], sizes = [8, 1], strides = [1, 1]} : vector<8x8xf32> to vector<8x1xf32>
    %255 = vector.extract_strided_slice %238 {offsets = [3, 0], sizes = [1, 8], strides = [1, 1]} : vector<8x8xf32> to vector<1x8xf32>
    %256 = vector.broadcast %254 : vector<8x1xf32> to vector<8x8xf32>
    %257 = vector.broadcast %255 : vector<1x8xf32> to vector<8x8xf32>
    %258 = arith.mulf %256, %257 : vector<8x8xf32>
    %259 = vector.extract_strided_slice %191 {offsets = [0, 4], sizes = [8, 1], strides = [1, 1]} : vector<8x8xf32> to vector<8x1xf32>
    %260 = vector.extract_strided_slice %238 {offsets = [4, 0], sizes = [1, 8], strides = [1, 1]} : vector<8x8xf32> to vector<1x8xf32>
    %261 = vector.broadcast %259 : vector<8x1xf32> to vector<8x8xf32>
    %262 = vector.broadcast %260 : vector<1x8xf32> to vector<8x8xf32>
    %263 = arith.mulf %261, %262 : vector<8x8xf32>
    %264 = vector.extract_strided_slice %191 {offsets = [0, 5], sizes = [8, 1], strides = [1, 1]} : vector<8x8xf32> to vector<8x1xf32>
    %265 = vector.extract_strided_slice %238 {offsets = [5, 0], sizes = [1, 8], strides = [1, 1]} : vector<8x8xf32> to vector<1x8xf32>
    %266 = vector.broadcast %264 : vector<8x1xf32> to vector<8x8xf32>
    %267 = vector.broadcast %265 : vector<1x8xf32> to vector<8x8xf32>
    %268 = arith.mulf %266, %267 : vector<8x8xf32>
    %269 = vector.extract_strided_slice %191 {offsets = [0, 6], sizes = [8, 1], strides = [1, 1]} : vector<8x8xf32> to vector<8x1xf32>
    %270 = vector.extract_strided_slice %238 {offsets = [6, 0], sizes = [1, 8], strides = [1, 1]} : vector<8x8xf32> to vector<1x8xf32>
    %271 = vector.broadcast %269 : vector<8x1xf32> to vector<8x8xf32>
    %272 = vector.broadcast %270 : vector<1x8xf32> to vector<8x8xf32>
    %273 = arith.mulf %271, %272 : vector<8x8xf32>
    %274 = vector.extract_strided_slice %191 {offsets = [0, 7], sizes = [8, 1], strides = [1, 1]} : vector<8x8xf32> to vector<8x1xf32>
    %275 = vector.extract_strided_slice %238 {offsets = [7, 0], sizes = [1, 8], strides = [1, 1]} : vector<8x8xf32> to vector<1x8xf32>
    %276 = vector.broadcast %274 : vector<8x1xf32> to vector<8x8xf32>
    %277 = vector.broadcast %275 : vector<1x8xf32> to vector<8x8xf32>
    %278 = arith.mulf %276, %277 : vector<8x8xf32>
    %279 = arith.addf %243, %248 : vector<8x8xf32>
    %280 = arith.addf %253, %258 : vector<8x8xf32>
    %281 = arith.addf %263, %268 : vector<8x8xf32>
    %282 = arith.addf %273, %278 : vector<8x8xf32>
    %283 = arith.addf %279, %280 : vector<8x8xf32>
    %284 = arith.addf %281, %282 : vector<8x8xf32>
    %285 = arith.addf %283, %284 : vector<8x8xf32>
    %286 = arith.addf %144, %285 : vector<8x8xf32>
    %287 = vector.extract_strided_slice %191 {offsets = [0, 0], sizes = [8, 1], strides = [1, 1]} : vector<8x8xf32> to vector<8x1xf32>
    %288 = vector.extract_strided_slice %191 {offsets = [0, 0], sizes = [1, 8], strides = [1, 1]} : vector<8x8xf32> to vector<1x8xf32>
    %289 = vector.broadcast %287 : vector<8x1xf32> to vector<8x8xf32>
    %290 = vector.broadcast %288 : vector<1x8xf32> to vector<8x8xf32>
    %291 = arith.mulf %289, %290 : vector<8x8xf32>
    %292 = vector.extract_strided_slice %191 {offsets = [0, 1], sizes = [8, 1], strides = [1, 1]} : vector<8x8xf32> to vector<8x1xf32>
    %293 = vector.extract_strided_slice %191 {offsets = [1, 0], sizes = [1, 8], strides = [1, 1]} : vector<8x8xf32> to vector<1x8xf32>
    %294 = vector.broadcast %292 : vector<8x1xf32> to vector<8x8xf32>
    %295 = vector.broadcast %293 : vector<1x8xf32> to vector<8x8xf32>
    %296 = arith.mulf %294, %295 : vector<8x8xf32>
    %297 = vector.extract_strided_slice %191 {offsets = [0, 2], sizes = [8, 1], strides = [1, 1]} : vector<8x8xf32> to vector<8x1xf32>
    %298 = vector.extract_strided_slice %191 {offsets = [2, 0], sizes = [1, 8], strides = [1, 1]} : vector<8x8xf32> to vector<1x8xf32>
    %299 = vector.broadcast %297 : vector<8x1xf32> to vector<8x8xf32>
    %300 = vector.broadcast %298 : vector<1x8xf32> to vector<8x8xf32>
    %301 = arith.mulf %299, %300 : vector<8x8xf32>
    %302 = vector.extract_strided_slice %191 {offsets = [0, 3], sizes = [8, 1], strides = [1, 1]} : vector<8x8xf32> to vector<8x1xf32>
    %303 = vector.extract_strided_slice %191 {offsets = [3, 0], sizes = [1, 8], strides = [1, 1]} : vector<8x8xf32> to vector<1x8xf32>
    %304 = vector.broadcast %302 : vector<8x1xf32> to vector<8x8xf32>
    %305 = vector.broadcast %303 : vector<1x8xf32> to vector<8x8xf32>
    %306 = arith.mulf %304, %305 : vector<8x8xf32>
    %307 = vector.extract_strided_slice %191 {offsets = [0, 4], sizes = [8, 1], strides = [1, 1]} : vector<8x8xf32> to vector<8x1xf32>
    %308 = vector.extract_strided_slice %191 {offsets = [4, 0], sizes = [1, 8], strides = [1, 1]} : vector<8x8xf32> to vector<1x8xf32>
    %309 = vector.broadcast %307 : vector<8x1xf32> to vector<8x8xf32>
    %310 = vector.broadcast %308 : vector<1x8xf32> to vector<8x8xf32>
    %311 = arith.mulf %309, %310 : vector<8x8xf32>
    %312 = vector.extract_strided_slice %191 {offsets = [0, 5], sizes = [8, 1], strides = [1, 1]} : vector<8x8xf32> to vector<8x1xf32>
    %313 = vector.extract_strided_slice %191 {offsets = [5, 0], sizes = [1, 8], strides = [1, 1]} : vector<8x8xf32> to vector<1x8xf32>
    %314 = vector.broadcast %312 : vector<8x1xf32> to vector<8x8xf32>
    %315 = vector.broadcast %313 : vector<1x8xf32> to vector<8x8xf32>
    %316 = arith.mulf %314, %315 : vector<8x8xf32>
    %317 = vector.extract_strided_slice %191 {offsets = [0, 6], sizes = [8, 1], strides = [1, 1]} : vector<8x8xf32> to vector<8x1xf32>
    %318 = vector.extract_strided_slice %191 {offsets = [6, 0], sizes = [1, 8], strides = [1, 1]} : vector<8x8xf32> to vector<1x8xf32>
    %319 = vector.broadcast %317 : vector<8x1xf32> to vector<8x8xf32>
    %320 = vector.broadcast %318 : vector<1x8xf32> to vector<8x8xf32>
    %321 = arith.mulf %319, %320 : vector<8x8xf32>
    %322 = vector.extract_strided_slice %191 {offsets = [0, 7], sizes = [8, 1], strides = [1, 1]} : vector<8x8xf32> to vector<8x1xf32>
    %323 = vector.extract_strided_slice %191 {offsets = [7, 0], sizes = [1, 8], strides = [1, 1]} : vector<8x8xf32> to vector<1x8xf32>
    %324 = vector.broadcast %322 : vector<8x1xf32> to vector<8x8xf32>
    %325 = vector.broadcast %323 : vector<1x8xf32> to vector<8x8xf32>
    %326 = arith.mulf %324, %325 : vector<8x8xf32>
    %327 = arith.addf %291, %296 : vector<8x8xf32>
    %328 = arith.addf %301, %306 : vector<8x8xf32>
    %329 = arith.addf %311, %316 : vector<8x8xf32>
    %330 = arith.addf %321, %326 : vector<8x8xf32>
    %331 = arith.addf %327, %328 : vector<8x8xf32>
    %332 = arith.addf %329, %330 : vector<8x8xf32>
    %333 = arith.addf %331, %332 : vector<8x8xf32>
    %334 = vector.extract_strided_slice %286 {offsets = [0, 0], sizes = [8, 1], strides = [1, 1]} : vector<8x8xf32> to vector<8x1xf32>
    %335 = vector.extract_strided_slice %333 {offsets = [0, 0], sizes = [1, 8], strides = [1, 1]} : vector<8x8xf32> to vector<1x8xf32>
    %336 = vector.broadcast %334 : vector<8x1xf32> to vector<8x8xf32>
    %337 = vector.broadcast %335 : vector<1x8xf32> to vector<8x8xf32>
    %338 = arith.mulf %336, %337 : vector<8x8xf32>
    %339 = vector.extract_strided_slice %286 {offsets = [0, 1], sizes = [8, 1], strides = [1, 1]} : vector<8x8xf32> to vector<8x1xf32>
    %340 = vector.extract_strided_slice %333 {offsets = [1, 0], sizes = [1, 8], strides = [1, 1]} : vector<8x8xf32> to vector<1x8xf32>
    %341 = vector.broadcast %339 : vector<8x1xf32> to vector<8x8xf32>
    %342 = vector.broadcast %340 : vector<1x8xf32> to vector<8x8xf32>
    %343 = arith.mulf %341, %342 : vector<8x8xf32>
    %344 = vector.extract_strided_slice %286 {offsets = [0, 2], sizes = [8, 1], strides = [1, 1]} : vector<8x8xf32> to vector<8x1xf32>
    %345 = vector.extract_strided_slice %333 {offsets = [2, 0], sizes = [1, 8], strides = [1, 1]} : vector<8x8xf32> to vector<1x8xf32>
    %346 = vector.broadcast %344 : vector<8x1xf32> to vector<8x8xf32>
    %347 = vector.broadcast %345 : vector<1x8xf32> to vector<8x8xf32>
    %348 = arith.mulf %346, %347 : vector<8x8xf32>
    %349 = vector.extract_strided_slice %286 {offsets = [0, 3], sizes = [8, 1], strides = [1, 1]} : vector<8x8xf32> to vector<8x1xf32>
    %350 = vector.extract_strided_slice %333 {offsets = [3, 0], sizes = [1, 8], strides = [1, 1]} : vector<8x8xf32> to vector<1x8xf32>
    %351 = vector.broadcast %349 : vector<8x1xf32> to vector<8x8xf32>
    %352 = vector.broadcast %350 : vector<1x8xf32> to vector<8x8xf32>
    %353 = arith.mulf %351, %352 : vector<8x8xf32>
    %354 = vector.extract_strided_slice %286 {offsets = [0, 4], sizes = [8, 1], strides = [1, 1]} : vector<8x8xf32> to vector<8x1xf32>
    %355 = vector.extract_strided_slice %333 {offsets = [4, 0], sizes = [1, 8], strides = [1, 1]} : vector<8x8xf32> to vector<1x8xf32>
    %356 = vector.broadcast %354 : vector<8x1xf32> to vector<8x8xf32>
    %357 = vector.broadcast %355 : vector<1x8xf32> to vector<8x8xf32>
    %358 = arith.mulf %356, %357 : vector<8x8xf32>
    %359 = vector.extract_strided_slice %286 {offsets = [0, 5], sizes = [8, 1], strides = [1, 1]} : vector<8x8xf32> to vector<8x1xf32>
    %360 = vector.extract_strided_slice %333 {offsets = [5, 0], sizes = [1, 8], strides = [1, 1]} : vector<8x8xf32> to vector<1x8xf32>
    %361 = vector.broadcast %359 : vector<8x1xf32> to vector<8x8xf32>
    %362 = vector.broadcast %360 : vector<1x8xf32> to vector<8x8xf32>
    %363 = arith.mulf %361, %362 : vector<8x8xf32>
    %364 = vector.extract_strided_slice %286 {offsets = [0, 6], sizes = [8, 1], strides = [1, 1]} : vector<8x8xf32> to vector<8x1xf32>
    %365 = vector.extract_strided_slice %333 {offsets = [6, 0], sizes = [1, 8], strides = [1, 1]} : vector<8x8xf32> to vector<1x8xf32>
    %366 = vector.broadcast %364 : vector<8x1xf32> to vector<8x8xf32>
    %367 = vector.broadcast %365 : vector<1x8xf32> to vector<8x8xf32>
    %368 = arith.mulf %366, %367 : vector<8x8xf32>
    %369 = vector.extract_strided_slice %286 {offsets = [0, 7], sizes = [8, 1], strides = [1, 1]} : vector<8x8xf32> to vector<8x1xf32>
    %370 = vector.extract_strided_slice %333 {offsets = [7, 0], sizes = [1, 8], strides = [1, 1]} : vector<8x8xf32> to vector<1x8xf32>
    %371 = vector.broadcast %369 : vector<8x1xf32> to vector<8x8xf32>
    %372 = vector.broadcast %370 : vector<1x8xf32> to vector<8x8xf32>
    %373 = arith.mulf %371, %372 : vector<8x8xf32>
    %374 = arith.addf %338, %343 : vector<8x8xf32>
    %375 = arith.addf %348, %353 : vector<8x8xf32>
    %376 = arith.addf %358, %363 : vector<8x8xf32>
    %377 = arith.addf %368, %373 : vector<8x8xf32>
    %378 = arith.addf %374, %375 : vector<8x8xf32>
    %379 = arith.addf %376, %377 : vector<8x8xf32>
    %380 = arith.addf %378, %379 : vector<8x8xf32>
    %381 = vector.extract_strided_slice %333 {offsets = [0, 0], sizes = [8, 1], strides = [1, 1]} : vector<8x8xf32> to vector<8x1xf32>
    %382 = vector.extract_strided_slice %380 {offsets = [0, 0], sizes = [1, 8], strides = [1, 1]} : vector<8x8xf32> to vector<1x8xf32>
    %383 = vector.broadcast %381 : vector<8x1xf32> to vector<8x8xf32>
    %384 = vector.broadcast %382 : vector<1x8xf32> to vector<8x8xf32>
    %385 = arith.mulf %383, %384 : vector<8x8xf32>
    %386 = vector.extract_strided_slice %333 {offsets = [0, 1], sizes = [8, 1], strides = [1, 1]} : vector<8x8xf32> to vector<8x1xf32>
    %387 = vector.extract_strided_slice %380 {offsets = [1, 0], sizes = [1, 8], strides = [1, 1]} : vector<8x8xf32> to vector<1x8xf32>
    %388 = vector.broadcast %386 : vector<8x1xf32> to vector<8x8xf32>
    %389 = vector.broadcast %387 : vector<1x8xf32> to vector<8x8xf32>
    %390 = arith.mulf %388, %389 : vector<8x8xf32>
    %391 = vector.extract_strided_slice %333 {offsets = [0, 2], sizes = [8, 1], strides = [1, 1]} : vector<8x8xf32> to vector<8x1xf32>
    %392 = vector.extract_strided_slice %380 {offsets = [2, 0], sizes = [1, 8], strides = [1, 1]} : vector<8x8xf32> to vector<1x8xf32>
    %393 = vector.broadcast %391 : vector<8x1xf32> to vector<8x8xf32>
    %394 = vector.broadcast %392 : vector<1x8xf32> to vector<8x8xf32>
    %395 = arith.mulf %393, %394 : vector<8x8xf32>
    %396 = vector.extract_strided_slice %333 {offsets = [0, 3], sizes = [8, 1], strides = [1, 1]} : vector<8x8xf32> to vector<8x1xf32>
    %397 = vector.extract_strided_slice %380 {offsets = [3, 0], sizes = [1, 8], strides = [1, 1]} : vector<8x8xf32> to vector<1x8xf32>
    %398 = vector.broadcast %396 : vector<8x1xf32> to vector<8x8xf32>
    %399 = vector.broadcast %397 : vector<1x8xf32> to vector<8x8xf32>
    %400 = arith.mulf %398, %399 : vector<8x8xf32>
    %401 = vector.extract_strided_slice %333 {offsets = [0, 4], sizes = [8, 1], strides = [1, 1]} : vector<8x8xf32> to vector<8x1xf32>
    %402 = vector.extract_strided_slice %380 {offsets = [4, 0], sizes = [1, 8], strides = [1, 1]} : vector<8x8xf32> to vector<1x8xf32>
    %403 = vector.broadcast %401 : vector<8x1xf32> to vector<8x8xf32>
    %404 = vector.broadcast %402 : vector<1x8xf32> to vector<8x8xf32>
    %405 = arith.mulf %403, %404 : vector<8x8xf32>
    %406 = vector.extract_strided_slice %333 {offsets = [0, 5], sizes = [8, 1], strides = [1, 1]} : vector<8x8xf32> to vector<8x1xf32>
    %407 = vector.extract_strided_slice %380 {offsets = [5, 0], sizes = [1, 8], strides = [1, 1]} : vector<8x8xf32> to vector<1x8xf32>
    %408 = vector.broadcast %406 : vector<8x1xf32> to vector<8x8xf32>
    %409 = vector.broadcast %407 : vector<1x8xf32> to vector<8x8xf32>
    %410 = arith.mulf %408, %409 : vector<8x8xf32>
    %411 = vector.extract_strided_slice %333 {offsets = [0, 6], sizes = [8, 1], strides = [1, 1]} : vector<8x8xf32> to vector<8x1xf32>
    %412 = vector.extract_strided_slice %380 {offsets = [6, 0], sizes = [1, 8], strides = [1, 1]} : vector<8x8xf32> to vector<1x8xf32>
    %413 = vector.broadcast %411 : vector<8x1xf32> to vector<8x8xf32>
    %414 = vector.broadcast %412 : vector<1x8xf32> to vector<8x8xf32>
    %415 = arith.mulf %413, %414 : vector<8x8xf32>
    %416 = vector.extract_strided_slice %333 {offsets = [0, 7], sizes = [8, 1], strides = [1, 1]} : vector<8x8xf32> to vector<8x1xf32>
    %417 = vector.extract_strided_slice %380 {offsets = [7, 0], sizes = [1, 8], strides = [1, 1]} : vector<8x8xf32> to vector<1x8xf32>
    %418 = vector.broadcast %416 : vector<8x1xf32> to vector<8x8xf32>
    %419 = vector.broadcast %417 : vector<1x8xf32> to vector<8x8xf32>
    %420 = arith.mulf %418, %419 : vector<8x8xf32>
    %421 = arith.addf %385, %390 : vector<8x8xf32>
    %422 = arith.addf %395, %400 : vector<8x8xf32>
    %423 = arith.addf %405, %410 : vector<8x8xf32>
    %424 = arith.addf %415, %420 : vector<8x8xf32>
    %425 = arith.addf %421, %422 : vector<8x8xf32>
    %426 = arith.addf %423, %424 : vector<8x8xf32>
    %427 = arith.addf %425, %426 : vector<8x8xf32>
    %428 = arith.addf %286, %427 : vector<8x8xf32>
    %429 = vector.extract_strided_slice %333 {offsets = [0, 0], sizes = [8, 1], strides = [1, 1]} : vector<8x8xf32> to vector<8x1xf32>
    %430 = vector.extract_strided_slice %333 {offsets = [0, 0], sizes = [1, 8], strides = [1, 1]} : vector<8x8xf32> to vector<1x8xf32>
    %431 = vector.broadcast %429 : vector<8x1xf32> to vector<8x8xf32>
    %432 = vector.broadcast %430 : vector<1x8xf32> to vector<8x8xf32>
    %433 = arith.mulf %431, %432 : vector<8x8xf32>
    %434 = vector.extract_strided_slice %333 {offsets = [0, 1], sizes = [8, 1], strides = [1, 1]} : vector<8x8xf32> to vector<8x1xf32>
    %435 = vector.extract_strided_slice %333 {offsets = [1, 0], sizes = [1, 8], strides = [1, 1]} : vector<8x8xf32> to vector<1x8xf32>
    %436 = vector.broadcast %434 : vector<8x1xf32> to vector<8x8xf32>
    %437 = vector.broadcast %435 : vector<1x8xf32> to vector<8x8xf32>
    %438 = arith.mulf %436, %437 : vector<8x8xf32>
    %439 = vector.extract_strided_slice %333 {offsets = [0, 2], sizes = [8, 1], strides = [1, 1]} : vector<8x8xf32> to vector<8x1xf32>
    %440 = vector.extract_strided_slice %333 {offsets = [2, 0], sizes = [1, 8], strides = [1, 1]} : vector<8x8xf32> to vector<1x8xf32>
    %441 = vector.broadcast %439 : vector<8x1xf32> to vector<8x8xf32>
    %442 = vector.broadcast %440 : vector<1x8xf32> to vector<8x8xf32>
    %443 = arith.mulf %441, %442 : vector<8x8xf32>
    %444 = vector.extract_strided_slice %333 {offsets = [0, 3], sizes = [8, 1], strides = [1, 1]} : vector<8x8xf32> to vector<8x1xf32>
    %445 = vector.extract_strided_slice %333 {offsets = [3, 0], sizes = [1, 8], strides = [1, 1]} : vector<8x8xf32> to vector<1x8xf32>
    %446 = vector.broadcast %444 : vector<8x1xf32> to vector<8x8xf32>
    %447 = vector.broadcast %445 : vector<1x8xf32> to vector<8x8xf32>
    %448 = arith.mulf %446, %447 : vector<8x8xf32>
    %449 = vector.extract_strided_slice %333 {offsets = [0, 4], sizes = [8, 1], strides = [1, 1]} : vector<8x8xf32> to vector<8x1xf32>
    %450 = vector.extract_strided_slice %333 {offsets = [4, 0], sizes = [1, 8], strides = [1, 1]} : vector<8x8xf32> to vector<1x8xf32>
    %451 = vector.broadcast %449 : vector<8x1xf32> to vector<8x8xf32>
    %452 = vector.broadcast %450 : vector<1x8xf32> to vector<8x8xf32>
    %453 = arith.mulf %451, %452 : vector<8x8xf32>
    %454 = vector.extract_strided_slice %333 {offsets = [0, 5], sizes = [8, 1], strides = [1, 1]} : vector<8x8xf32> to vector<8x1xf32>
    %455 = vector.extract_strided_slice %333 {offsets = [5, 0], sizes = [1, 8], strides = [1, 1]} : vector<8x8xf32> to vector<1x8xf32>
    %456 = vector.broadcast %454 : vector<8x1xf32> to vector<8x8xf32>
    %457 = vector.broadcast %455 : vector<1x8xf32> to vector<8x8xf32>
    %458 = arith.mulf %456, %457 : vector<8x8xf32>
    %459 = vector.extract_strided_slice %333 {offsets = [0, 6], sizes = [8, 1], strides = [1, 1]} : vector<8x8xf32> to vector<8x1xf32>
    %460 = vector.extract_strided_slice %333 {offsets = [6, 0], sizes = [1, 8], strides = [1, 1]} : vector<8x8xf32> to vector<1x8xf32>
    %461 = vector.broadcast %459 : vector<8x1xf32> to vector<8x8xf32>
    %462 = vector.broadcast %460 : vector<1x8xf32> to vector<8x8xf32>
    %463 = arith.mulf %461, %462 : vector<8x8xf32>
    %464 = vector.extract_strided_slice %333 {offsets = [0, 7], sizes = [8, 1], strides = [1, 1]} : vector<8x8xf32> to vector<8x1xf32>
    %465 = vector.extract_strided_slice %333 {offsets = [7, 0], sizes = [1, 8], strides = [1, 1]} : vector<8x8xf32> to vector<1x8xf32>
    %466 = vector.broadcast %464 : vector<8x1xf32> to vector<8x8xf32>
    %467 = vector.broadcast %465 : vector<1x8xf32> to vector<8x8xf32>
    %468 = arith.mulf %466, %467 : vector<8x8xf32>
    %469 = arith.addf %433, %438 : vector<8x8xf32>
    %470 = arith.addf %443, %448 : vector<8x8xf32>
    %471 = arith.addf %453, %458 : vector<8x8xf32>
    %472 = arith.addf %463, %468 : vector<8x8xf32>
    %473 = arith.addf %469, %470 : vector<8x8xf32>
    %474 = arith.addf %471, %472 : vector<8x8xf32>
    %475 = arith.addf %473, %474 : vector<8x8xf32>
    %476 = vector.extract_strided_slice %428 {offsets = [0, 0], sizes = [8, 1], strides = [1, 1]} : vector<8x8xf32> to vector<8x1xf32>
    %477 = vector.extract_strided_slice %475 {offsets = [0, 0], sizes = [1, 8], strides = [1, 1]} : vector<8x8xf32> to vector<1x8xf32>
    %478 = vector.broadcast %476 : vector<8x1xf32> to vector<8x8xf32>
    %479 = vector.broadcast %477 : vector<1x8xf32> to vector<8x8xf32>
    %480 = arith.mulf %478, %479 : vector<8x8xf32>
    %481 = vector.extract_strided_slice %428 {offsets = [0, 1], sizes = [8, 1], strides = [1, 1]} : vector<8x8xf32> to vector<8x1xf32>
    %482 = vector.extract_strided_slice %475 {offsets = [1, 0], sizes = [1, 8], strides = [1, 1]} : vector<8x8xf32> to vector<1x8xf32>
    %483 = vector.broadcast %481 : vector<8x1xf32> to vector<8x8xf32>
    %484 = vector.broadcast %482 : vector<1x8xf32> to vector<8x8xf32>
    %485 = arith.mulf %483, %484 : vector<8x8xf32>
    %486 = vector.extract_strided_slice %428 {offsets = [0, 2], sizes = [8, 1], strides = [1, 1]} : vector<8x8xf32> to vector<8x1xf32>
    %487 = vector.extract_strided_slice %475 {offsets = [2, 0], sizes = [1, 8], strides = [1, 1]} : vector<8x8xf32> to vector<1x8xf32>
    %488 = vector.broadcast %486 : vector<8x1xf32> to vector<8x8xf32>
    %489 = vector.broadcast %487 : vector<1x8xf32> to vector<8x8xf32>
    %490 = arith.mulf %488, %489 : vector<8x8xf32>
    %491 = vector.extract_strided_slice %428 {offsets = [0, 3], sizes = [8, 1], strides = [1, 1]} : vector<8x8xf32> to vector<8x1xf32>
    %492 = vector.extract_strided_slice %475 {offsets = [3, 0], sizes = [1, 8], strides = [1, 1]} : vector<8x8xf32> to vector<1x8xf32>
    %493 = vector.broadcast %491 : vector<8x1xf32> to vector<8x8xf32>
    %494 = vector.broadcast %492 : vector<1x8xf32> to vector<8x8xf32>
    %495 = arith.mulf %493, %494 : vector<8x8xf32>
    %496 = vector.extract_strided_slice %428 {offsets = [0, 4], sizes = [8, 1], strides = [1, 1]} : vector<8x8xf32> to vector<8x1xf32>
    %497 = vector.extract_strided_slice %475 {offsets = [4, 0], sizes = [1, 8], strides = [1, 1]} : vector<8x8xf32> to vector<1x8xf32>
    %498 = vector.broadcast %496 : vector<8x1xf32> to vector<8x8xf32>
    %499 = vector.broadcast %497 : vector<1x8xf32> to vector<8x8xf32>
    %500 = arith.mulf %498, %499 : vector<8x8xf32>
    %501 = vector.extract_strided_slice %428 {offsets = [0, 5], sizes = [8, 1], strides = [1, 1]} : vector<8x8xf32> to vector<8x1xf32>
    %502 = vector.extract_strided_slice %475 {offsets = [5, 0], sizes = [1, 8], strides = [1, 1]} : vector<8x8xf32> to vector<1x8xf32>
    %503 = vector.broadcast %501 : vector<8x1xf32> to vector<8x8xf32>
    %504 = vector.broadcast %502 : vector<1x8xf32> to vector<8x8xf32>
    %505 = arith.mulf %503, %504 : vector<8x8xf32>
    %506 = vector.extract_strided_slice %428 {offsets = [0, 6], sizes = [8, 1], strides = [1, 1]} : vector<8x8xf32> to vector<8x1xf32>
    %507 = vector.extract_strided_slice %475 {offsets = [6, 0], sizes = [1, 8], strides = [1, 1]} : vector<8x8xf32> to vector<1x8xf32>
    %508 = vector.broadcast %506 : vector<8x1xf32> to vector<8x8xf32>
    %509 = vector.broadcast %507 : vector<1x8xf32> to vector<8x8xf32>
    %510 = arith.mulf %508, %509 : vector<8x8xf32>
    %511 = vector.extract_strided_slice %428 {offsets = [0, 7], sizes = [8, 1], strides = [1, 1]} : vector<8x8xf32> to vector<8x1xf32>
    %512 = vector.extract_strided_slice %475 {offsets = [7, 0], sizes = [1, 8], strides = [1, 1]} : vector<8x8xf32> to vector<1x8xf32>
    %513 = vector.broadcast %511 : vector<8x1xf32> to vector<8x8xf32>
    %514 = vector.broadcast %512 : vector<1x8xf32> to vector<8x8xf32>
    %515 = arith.mulf %513, %514 : vector<8x8xf32>
    %516 = arith.addf %480, %485 : vector<8x8xf32>
    %517 = arith.addf %490, %495 : vector<8x8xf32>
    %518 = arith.addf %500, %505 : vector<8x8xf32>
    %519 = arith.addf %510, %515 : vector<8x8xf32>
    %520 = arith.addf %516, %517 : vector<8x8xf32>
    %521 = arith.addf %518, %519 : vector<8x8xf32>
    %522 = arith.addf %520, %521 : vector<8x8xf32>
    %523 = vector.extract_strided_slice %475 {offsets = [0, 0], sizes = [8, 1], strides = [1, 1]} : vector<8x8xf32> to vector<8x1xf32>
    %524 = vector.extract_strided_slice %522 {offsets = [0, 0], sizes = [1, 8], strides = [1, 1]} : vector<8x8xf32> to vector<1x8xf32>
    %525 = vector.broadcast %523 : vector<8x1xf32> to vector<8x8xf32>
    %526 = vector.broadcast %524 : vector<1x8xf32> to vector<8x8xf32>
    %527 = arith.mulf %525, %526 : vector<8x8xf32>
    %528 = vector.extract_strided_slice %475 {offsets = [0, 1], sizes = [8, 1], strides = [1, 1]} : vector<8x8xf32> to vector<8x1xf32>
    %529 = vector.extract_strided_slice %522 {offsets = [1, 0], sizes = [1, 8], strides = [1, 1]} : vector<8x8xf32> to vector<1x8xf32>
    %530 = vector.broadcast %528 : vector<8x1xf32> to vector<8x8xf32>
    %531 = vector.broadcast %529 : vector<1x8xf32> to vector<8x8xf32>
    %532 = arith.mulf %530, %531 : vector<8x8xf32>
    %533 = vector.extract_strided_slice %475 {offsets = [0, 2], sizes = [8, 1], strides = [1, 1]} : vector<8x8xf32> to vector<8x1xf32>
    %534 = vector.extract_strided_slice %522 {offsets = [2, 0], sizes = [1, 8], strides = [1, 1]} : vector<8x8xf32> to vector<1x8xf32>
    %535 = vector.broadcast %533 : vector<8x1xf32> to vector<8x8xf32>
    %536 = vector.broadcast %534 : vector<1x8xf32> to vector<8x8xf32>
    %537 = arith.mulf %535, %536 : vector<8x8xf32>
    %538 = vector.extract_strided_slice %475 {offsets = [0, 3], sizes = [8, 1], strides = [1, 1]} : vector<8x8xf32> to vector<8x1xf32>
    %539 = vector.extract_strided_slice %522 {offsets = [3, 0], sizes = [1, 8], strides = [1, 1]} : vector<8x8xf32> to vector<1x8xf32>
    %540 = vector.broadcast %538 : vector<8x1xf32> to vector<8x8xf32>
    %541 = vector.broadcast %539 : vector<1x8xf32> to vector<8x8xf32>
    %542 = arith.mulf %540, %541 : vector<8x8xf32>
    %543 = vector.extract_strided_slice %475 {offsets = [0, 4], sizes = [8, 1], strides = [1, 1]} : vector<8x8xf32> to vector<8x1xf32>
    %544 = vector.extract_strided_slice %522 {offsets = [4, 0], sizes = [1, 8], strides = [1, 1]} : vector<8x8xf32> to vector<1x8xf32>
    %545 = vector.broadcast %543 : vector<8x1xf32> to vector<8x8xf32>
    %546 = vector.broadcast %544 : vector<1x8xf32> to vector<8x8xf32>
    %547 = arith.mulf %545, %546 : vector<8x8xf32>
    %548 = vector.extract_strided_slice %475 {offsets = [0, 5], sizes = [8, 1], strides = [1, 1]} : vector<8x8xf32> to vector<8x1xf32>
    %549 = vector.extract_strided_slice %522 {offsets = [5, 0], sizes = [1, 8], strides = [1, 1]} : vector<8x8xf32> to vector<1x8xf32>
    %550 = vector.broadcast %548 : vector<8x1xf32> to vector<8x8xf32>
    %551 = vector.broadcast %549 : vector<1x8xf32> to vector<8x8xf32>
    %552 = arith.mulf %550, %551 : vector<8x8xf32>
    %553 = vector.extract_strided_slice %475 {offsets = [0, 6], sizes = [8, 1], strides = [1, 1]} : vector<8x8xf32> to vector<8x1xf32>
    %554 = vector.extract_strided_slice %522 {offsets = [6, 0], sizes = [1, 8], strides = [1, 1]} : vector<8x8xf32> to vector<1x8xf32>
    %555 = vector.broadcast %553 : vector<8x1xf32> to vector<8x8xf32>
    %556 = vector.broadcast %554 : vector<1x8xf32> to vector<8x8xf32>
    %557 = arith.mulf %555, %556 : vector<8x8xf32>
    %558 = vector.extract_strided_slice %475 {offsets = [0, 7], sizes = [8, 1], strides = [1, 1]} : vector<8x8xf32> to vector<8x1xf32>
    %559 = vector.extract_strided_slice %522 {offsets = [7, 0], sizes = [1, 8], strides = [1, 1]} : vector<8x8xf32> to vector<1x8xf32>
    %560 = vector.broadcast %558 : vector<8x1xf32> to vector<8x8xf32>
    %561 = vector.broadcast %559 : vector<1x8xf32> to vector<8x8xf32>
    %562 = arith.mulf %560, %561 : vector<8x8xf32>
    %563 = arith.addf %527, %532 : vector<8x8xf32>
    %564 = arith.addf %537, %542 : vector<8x8xf32>
    %565 = arith.addf %547, %552 : vector<8x8xf32>
    %566 = arith.addf %557, %562 : vector<8x8xf32>
    %567 = arith.addf %563, %564 : vector<8x8xf32>
    %568 = arith.addf %565, %566 : vector<8x8xf32>
    %569 = arith.addf %567, %568 : vector<8x8xf32>
    %570 = arith.addf %428, %569 : vector<8x8xf32>
    %571 = vector.extract_strided_slice %475 {offsets = [0, 0], sizes = [8, 1], strides = [1, 1]} : vector<8x8xf32> to vector<8x1xf32>
    %572 = vector.extract_strided_slice %475 {offsets = [0, 0], sizes = [1, 8], strides = [1, 1]} : vector<8x8xf32> to vector<1x8xf32>
    %573 = vector.broadcast %571 : vector<8x1xf32> to vector<8x8xf32>
    %574 = vector.broadcast %572 : vector<1x8xf32> to vector<8x8xf32>
    %575 = arith.mulf %573, %574 : vector<8x8xf32>
    %576 = vector.extract_strided_slice %475 {offsets = [0, 1], sizes = [8, 1], strides = [1, 1]} : vector<8x8xf32> to vector<8x1xf32>
    %577 = vector.extract_strided_slice %475 {offsets = [1, 0], sizes = [1, 8], strides = [1, 1]} : vector<8x8xf32> to vector<1x8xf32>
    %578 = vector.broadcast %576 : vector<8x1xf32> to vector<8x8xf32>
    %579 = vector.broadcast %577 : vector<1x8xf32> to vector<8x8xf32>
    %580 = arith.mulf %578, %579 : vector<8x8xf32>
    %581 = vector.extract_strided_slice %475 {offsets = [0, 2], sizes = [8, 1], strides = [1, 1]} : vector<8x8xf32> to vector<8x1xf32>
    %582 = vector.extract_strided_slice %475 {offsets = [2, 0], sizes = [1, 8], strides = [1, 1]} : vector<8x8xf32> to vector<1x8xf32>
    %583 = vector.broadcast %581 : vector<8x1xf32> to vector<8x8xf32>
    %584 = vector.broadcast %582 : vector<1x8xf32> to vector<8x8xf32>
    %585 = arith.mulf %583, %584 : vector<8x8xf32>
    %586 = vector.extract_strided_slice %475 {offsets = [0, 3], sizes = [8, 1], strides = [1, 1]} : vector<8x8xf32> to vector<8x1xf32>
    %587 = vector.extract_strided_slice %475 {offsets = [3, 0], sizes = [1, 8], strides = [1, 1]} : vector<8x8xf32> to vector<1x8xf32>
    %588 = vector.broadcast %586 : vector<8x1xf32> to vector<8x8xf32>
    %589 = vector.broadcast %587 : vector<1x8xf32> to vector<8x8xf32>
    %590 = arith.mulf %588, %589 : vector<8x8xf32>
    %591 = vector.extract_strided_slice %475 {offsets = [0, 4], sizes = [8, 1], strides = [1, 1]} : vector<8x8xf32> to vector<8x1xf32>
    %592 = vector.extract_strided_slice %475 {offsets = [4, 0], sizes = [1, 8], strides = [1, 1]} : vector<8x8xf32> to vector<1x8xf32>
    %593 = vector.broadcast %591 : vector<8x1xf32> to vector<8x8xf32>
    %594 = vector.broadcast %592 : vector<1x8xf32> to vector<8x8xf32>
    %595 = arith.mulf %593, %594 : vector<8x8xf32>
    %596 = vector.extract_strided_slice %475 {offsets = [0, 5], sizes = [8, 1], strides = [1, 1]} : vector<8x8xf32> to vector<8x1xf32>
    %597 = vector.extract_strided_slice %475 {offsets = [5, 0], sizes = [1, 8], strides = [1, 1]} : vector<8x8xf32> to vector<1x8xf32>
    %598 = vector.broadcast %596 : vector<8x1xf32> to vector<8x8xf32>
    %599 = vector.broadcast %597 : vector<1x8xf32> to vector<8x8xf32>
    %600 = arith.mulf %598, %599 : vector<8x8xf32>
    %601 = vector.extract_strided_slice %475 {offsets = [0, 6], sizes = [8, 1], strides = [1, 1]} : vector<8x8xf32> to vector<8x1xf32>
    %602 = vector.extract_strided_slice %475 {offsets = [6, 0], sizes = [1, 8], strides = [1, 1]} : vector<8x8xf32> to vector<1x8xf32>
    %603 = vector.broadcast %601 : vector<8x1xf32> to vector<8x8xf32>
    %604 = vector.broadcast %602 : vector<1x8xf32> to vector<8x8xf32>
    %605 = arith.mulf %603, %604 : vector<8x8xf32>
    %606 = vector.extract_strided_slice %475 {offsets = [0, 7], sizes = [8, 1], strides = [1, 1]} : vector<8x8xf32> to vector<8x1xf32>
    %607 = vector.extract_strided_slice %475 {offsets = [7, 0], sizes = [1, 8], strides = [1, 1]} : vector<8x8xf32> to vector<1x8xf32>
    %608 = vector.broadcast %606 : vector<8x1xf32> to vector<8x8xf32>
    %609 = vector.broadcast %607 : vector<1x8xf32> to vector<8x8xf32>
    %610 = arith.mulf %608, %609 : vector<8x8xf32>
    %611 = arith.addf %575, %580 : vector<8x8xf32>
    %612 = arith.addf %585, %590 : vector<8x8xf32>
    %613 = arith.addf %595, %600 : vector<8x8xf32>
    %614 = arith.addf %605, %610 : vector<8x8xf32>
    %615 = arith.addf %611, %612 : vector<8x8xf32>
    %616 = arith.addf %613, %614 : vector<8x8xf32>
    %617 = arith.addf %615, %616 : vector<8x8xf32>
    %618 = vector.extract_strided_slice %570 {offsets = [0, 0], sizes = [8, 1], strides = [1, 1]} : vector<8x8xf32> to vector<8x1xf32>
    %619 = vector.extract_strided_slice %617 {offsets = [0, 0], sizes = [1, 8], strides = [1, 1]} : vector<8x8xf32> to vector<1x8xf32>
    %620 = vector.broadcast %618 : vector<8x1xf32> to vector<8x8xf32>
    %621 = vector.broadcast %619 : vector<1x8xf32> to vector<8x8xf32>
    %622 = arith.mulf %620, %621 : vector<8x8xf32>
    %623 = vector.extract_strided_slice %570 {offsets = [0, 1], sizes = [8, 1], strides = [1, 1]} : vector<8x8xf32> to vector<8x1xf32>
    %624 = vector.extract_strided_slice %617 {offsets = [1, 0], sizes = [1, 8], strides = [1, 1]} : vector<8x8xf32> to vector<1x8xf32>
    %625 = vector.broadcast %623 : vector<8x1xf32> to vector<8x8xf32>
    %626 = vector.broadcast %624 : vector<1x8xf32> to vector<8x8xf32>
    %627 = arith.mulf %625, %626 : vector<8x8xf32>
    %628 = vector.extract_strided_slice %570 {offsets = [0, 2], sizes = [8, 1], strides = [1, 1]} : vector<8x8xf32> to vector<8x1xf32>
    %629 = vector.extract_strided_slice %617 {offsets = [2, 0], sizes = [1, 8], strides = [1, 1]} : vector<8x8xf32> to vector<1x8xf32>
    %630 = vector.broadcast %628 : vector<8x1xf32> to vector<8x8xf32>
    %631 = vector.broadcast %629 : vector<1x8xf32> to vector<8x8xf32>
    %632 = arith.mulf %630, %631 : vector<8x8xf32>
    %633 = vector.extract_strided_slice %570 {offsets = [0, 3], sizes = [8, 1], strides = [1, 1]} : vector<8x8xf32> to vector<8x1xf32>
    %634 = vector.extract_strided_slice %617 {offsets = [3, 0], sizes = [1, 8], strides = [1, 1]} : vector<8x8xf32> to vector<1x8xf32>
    %635 = vector.broadcast %633 : vector<8x1xf32> to vector<8x8xf32>
    %636 = vector.broadcast %634 : vector<1x8xf32> to vector<8x8xf32>
    %637 = arith.mulf %635, %636 : vector<8x8xf32>
    %638 = vector.extract_strided_slice %570 {offsets = [0, 4], sizes = [8, 1], strides = [1, 1]} : vector<8x8xf32> to vector<8x1xf32>
    %639 = vector.extract_strided_slice %617 {offsets = [4, 0], sizes = [1, 8], strides = [1, 1]} : vector<8x8xf32> to vector<1x8xf32>
    %640 = vector.broadcast %638 : vector<8x1xf32> to vector<8x8xf32>
    %641 = vector.broadcast %639 : vector<1x8xf32> to vector<8x8xf32>
    %642 = arith.mulf %640, %641 : vector<8x8xf32>
    %643 = vector.extract_strided_slice %570 {offsets = [0, 5], sizes = [8, 1], strides = [1, 1]} : vector<8x8xf32> to vector<8x1xf32>
    %644 = vector.extract_strided_slice %617 {offsets = [5, 0], sizes = [1, 8], strides = [1, 1]} : vector<8x8xf32> to vector<1x8xf32>
    %645 = vector.broadcast %643 : vector<8x1xf32> to vector<8x8xf32>
    %646 = vector.broadcast %644 : vector<1x8xf32> to vector<8x8xf32>
    %647 = arith.mulf %645, %646 : vector<8x8xf32>
    %648 = vector.extract_strided_slice %570 {offsets = [0, 6], sizes = [8, 1], strides = [1, 1]} : vector<8x8xf32> to vector<8x1xf32>
    %649 = vector.extract_strided_slice %617 {offsets = [6, 0], sizes = [1, 8], strides = [1, 1]} : vector<8x8xf32> to vector<1x8xf32>
    %650 = vector.broadcast %648 : vector<8x1xf32> to vector<8x8xf32>
    %651 = vector.broadcast %649 : vector<1x8xf32> to vector<8x8xf32>
    %652 = arith.mulf %650, %651 : vector<8x8xf32>
    %653 = vector.extract_strided_slice %570 {offsets = [0, 7], sizes = [8, 1], strides = [1, 1]} : vector<8x8xf32> to vector<8x1xf32>
    %654 = vector.extract_strided_slice %617 {offsets = [7, 0], sizes = [1, 8], strides = [1, 1]} : vector<8x8xf32> to vector<1x8xf32>
    %655 = vector.broadcast %653 : vector<8x1xf32> to vector<8x8xf32>
    %656 = vector.broadcast %654 : vector<1x8xf32> to vector<8x8xf32>
    %657 = arith.mulf %655, %656 : vector<8x8xf32>
    %658 = arith.addf %622, %627 : vector<8x8xf32>
    %659 = arith.addf %632, %637 : vector<8x8xf32>
    %660 = arith.addf %642, %647 : vector<8x8xf32>
    %661 = arith.addf %652, %657 : vector<8x8xf32>
    %662 = arith.addf %658, %659 : vector<8x8xf32>
    %663 = arith.addf %660, %661 : vector<8x8xf32>
    %664 = arith.addf %662, %663 : vector<8x8xf32>
    %665 = vector.extract_strided_slice %617 {offsets = [0, 0], sizes = [8, 1], strides = [1, 1]} : vector<8x8xf32> to vector<8x1xf32>
    %666 = vector.extract_strided_slice %664 {offsets = [0, 0], sizes = [1, 8], strides = [1, 1]} : vector<8x8xf32> to vector<1x8xf32>
    %667 = vector.broadcast %665 : vector<8x1xf32> to vector<8x8xf32>
    %668 = vector.broadcast %666 : vector<1x8xf32> to vector<8x8xf32>
    %669 = arith.mulf %667, %668 : vector<8x8xf32>
    %670 = vector.extract_strided_slice %617 {offsets = [0, 1], sizes = [8, 1], strides = [1, 1]} : vector<8x8xf32> to vector<8x1xf32>
    %671 = vector.extract_strided_slice %664 {offsets = [1, 0], sizes = [1, 8], strides = [1, 1]} : vector<8x8xf32> to vector<1x8xf32>
    %672 = vector.broadcast %670 : vector<8x1xf32> to vector<8x8xf32>
    %673 = vector.broadcast %671 : vector<1x8xf32> to vector<8x8xf32>
    %674 = arith.mulf %672, %673 : vector<8x8xf32>
    %675 = vector.extract_strided_slice %617 {offsets = [0, 2], sizes = [8, 1], strides = [1, 1]} : vector<8x8xf32> to vector<8x1xf32>
    %676 = vector.extract_strided_slice %664 {offsets = [2, 0], sizes = [1, 8], strides = [1, 1]} : vector<8x8xf32> to vector<1x8xf32>
    %677 = vector.broadcast %675 : vector<8x1xf32> to vector<8x8xf32>
    %678 = vector.broadcast %676 : vector<1x8xf32> to vector<8x8xf32>
    %679 = arith.mulf %677, %678 : vector<8x8xf32>
    %680 = vector.extract_strided_slice %617 {offsets = [0, 3], sizes = [8, 1], strides = [1, 1]} : vector<8x8xf32> to vector<8x1xf32>
    %681 = vector.extract_strided_slice %664 {offsets = [3, 0], sizes = [1, 8], strides = [1, 1]} : vector<8x8xf32> to vector<1x8xf32>
    %682 = vector.broadcast %680 : vector<8x1xf32> to vector<8x8xf32>
    %683 = vector.broadcast %681 : vector<1x8xf32> to vector<8x8xf32>
    %684 = arith.mulf %682, %683 : vector<8x8xf32>
    %685 = vector.extract_strided_slice %617 {offsets = [0, 4], sizes = [8, 1], strides = [1, 1]} : vector<8x8xf32> to vector<8x1xf32>
    %686 = vector.extract_strided_slice %664 {offsets = [4, 0], sizes = [1, 8], strides = [1, 1]} : vector<8x8xf32> to vector<1x8xf32>
    %687 = vector.broadcast %685 : vector<8x1xf32> to vector<8x8xf32>
    %688 = vector.broadcast %686 : vector<1x8xf32> to vector<8x8xf32>
    %689 = arith.mulf %687, %688 : vector<8x8xf32>
    %690 = vector.extract_strided_slice %617 {offsets = [0, 5], sizes = [8, 1], strides = [1, 1]} : vector<8x8xf32> to vector<8x1xf32>
    %691 = vector.extract_strided_slice %664 {offsets = [5, 0], sizes = [1, 8], strides = [1, 1]} : vector<8x8xf32> to vector<1x8xf32>
    %692 = vector.broadcast %690 : vector<8x1xf32> to vector<8x8xf32>
    %693 = vector.broadcast %691 : vector<1x8xf32> to vector<8x8xf32>
    %694 = arith.mulf %692, %693 : vector<8x8xf32>
    %695 = vector.extract_strided_slice %617 {offsets = [0, 6], sizes = [8, 1], strides = [1, 1]} : vector<8x8xf32> to vector<8x1xf32>
    %696 = vector.extract_strided_slice %664 {offsets = [6, 0], sizes = [1, 8], strides = [1, 1]} : vector<8x8xf32> to vector<1x8xf32>
    %697 = vector.broadcast %695 : vector<8x1xf32> to vector<8x8xf32>
    %698 = vector.broadcast %696 : vector<1x8xf32> to vector<8x8xf32>
    %699 = arith.mulf %697, %698 : vector<8x8xf32>
    %700 = vector.extract_strided_slice %617 {offsets = [0, 7], sizes = [8, 1], strides = [1, 1]} : vector<8x8xf32> to vector<8x1xf32>
    %701 = vector.extract_strided_slice %664 {offsets = [7, 0], sizes = [1, 8], strides = [1, 1]} : vector<8x8xf32> to vector<1x8xf32>
    %702 = vector.broadcast %700 : vector<8x1xf32> to vector<8x8xf32>
    %703 = vector.broadcast %701 : vector<1x8xf32> to vector<8x8xf32>
    %704 = arith.mulf %702, %703 : vector<8x8xf32>
    %705 = arith.addf %669, %674 : vector<8x8xf32>
    %706 = arith.addf %679, %684 : vector<8x8xf32>
    %707 = arith.addf %689, %694 : vector<8x8xf32>
    %708 = arith.addf %699, %704 : vector<8x8xf32>
    %709 = arith.addf %705, %706 : vector<8x8xf32>
    %710 = arith.addf %707, %708 : vector<8x8xf32>
    %711 = arith.addf %709, %710 : vector<8x8xf32>
    %712 = arith.addf %570, %711 : vector<8x8xf32>
    %713 = vector.extract_strided_slice %617 {offsets = [0, 0], sizes = [8, 1], strides = [1, 1]} : vector<8x8xf32> to vector<8x1xf32>
    %714 = vector.extract_strided_slice %617 {offsets = [0, 0], sizes = [1, 8], strides = [1, 1]} : vector<8x8xf32> to vector<1x8xf32>
    %715 = vector.broadcast %713 : vector<8x1xf32> to vector<8x8xf32>
    %716 = vector.broadcast %714 : vector<1x8xf32> to vector<8x8xf32>
    %717 = arith.mulf %715, %716 : vector<8x8xf32>
    %718 = vector.extract_strided_slice %617 {offsets = [0, 1], sizes = [8, 1], strides = [1, 1]} : vector<8x8xf32> to vector<8x1xf32>
    %719 = vector.extract_strided_slice %617 {offsets = [1, 0], sizes = [1, 8], strides = [1, 1]} : vector<8x8xf32> to vector<1x8xf32>
    %720 = vector.broadcast %718 : vector<8x1xf32> to vector<8x8xf32>
    %721 = vector.broadcast %719 : vector<1x8xf32> to vector<8x8xf32>
    %722 = arith.mulf %720, %721 : vector<8x8xf32>
    %723 = vector.extract_strided_slice %617 {offsets = [0, 2], sizes = [8, 1], strides = [1, 1]} : vector<8x8xf32> to vector<8x1xf32>
    %724 = vector.extract_strided_slice %617 {offsets = [2, 0], sizes = [1, 8], strides = [1, 1]} : vector<8x8xf32> to vector<1x8xf32>
    %725 = vector.broadcast %723 : vector<8x1xf32> to vector<8x8xf32>
    %726 = vector.broadcast %724 : vector<1x8xf32> to vector<8x8xf32>
    %727 = arith.mulf %725, %726 : vector<8x8xf32>
    %728 = vector.extract_strided_slice %617 {offsets = [0, 3], sizes = [8, 1], strides = [1, 1]} : vector<8x8xf32> to vector<8x1xf32>
    %729 = vector.extract_strided_slice %617 {offsets = [3, 0], sizes = [1, 8], strides = [1, 1]} : vector<8x8xf32> to vector<1x8xf32>
    %730 = vector.broadcast %728 : vector<8x1xf32> to vector<8x8xf32>
    %731 = vector.broadcast %729 : vector<1x8xf32> to vector<8x8xf32>
    %732 = arith.mulf %730, %731 : vector<8x8xf32>
    %733 = vector.extract_strided_slice %617 {offsets = [0, 4], sizes = [8, 1], strides = [1, 1]} : vector<8x8xf32> to vector<8x1xf32>
    %734 = vector.extract_strided_slice %617 {offsets = [4, 0], sizes = [1, 8], strides = [1, 1]} : vector<8x8xf32> to vector<1x8xf32>
    %735 = vector.broadcast %733 : vector<8x1xf32> to vector<8x8xf32>
    %736 = vector.broadcast %734 : vector<1x8xf32> to vector<8x8xf32>
    %737 = arith.mulf %735, %736 : vector<8x8xf32>
    %738 = vector.extract_strided_slice %617 {offsets = [0, 5], sizes = [8, 1], strides = [1, 1]} : vector<8x8xf32> to vector<8x1xf32>
    %739 = vector.extract_strided_slice %617 {offsets = [5, 0], sizes = [1, 8], strides = [1, 1]} : vector<8x8xf32> to vector<1x8xf32>
    %740 = vector.broadcast %738 : vector<8x1xf32> to vector<8x8xf32>
    %741 = vector.broadcast %739 : vector<1x8xf32> to vector<8x8xf32>
    %742 = arith.mulf %740, %741 : vector<8x8xf32>
    %743 = vector.extract_strided_slice %617 {offsets = [0, 6], sizes = [8, 1], strides = [1, 1]} : vector<8x8xf32> to vector<8x1xf32>
    %744 = vector.extract_strided_slice %617 {offsets = [6, 0], sizes = [1, 8], strides = [1, 1]} : vector<8x8xf32> to vector<1x8xf32>
    %745 = vector.broadcast %743 : vector<8x1xf32> to vector<8x8xf32>
    %746 = vector.broadcast %744 : vector<1x8xf32> to vector<8x8xf32>
    %747 = arith.mulf %745, %746 : vector<8x8xf32>
    %748 = vector.extract_strided_slice %617 {offsets = [0, 7], sizes = [8, 1], strides = [1, 1]} : vector<8x8xf32> to vector<8x1xf32>
    %749 = vector.extract_strided_slice %617 {offsets = [7, 0], sizes = [1, 8], strides = [1, 1]} : vector<8x8xf32> to vector<1x8xf32>
    %750 = vector.broadcast %748 : vector<8x1xf32> to vector<8x8xf32>
    %751 = vector.broadcast %749 : vector<1x8xf32> to vector<8x8xf32>
    %752 = arith.mulf %750, %751 : vector<8x8xf32>
    %753 = arith.addf %717, %722 : vector<8x8xf32>
    %754 = arith.addf %727, %732 : vector<8x8xf32>
    %755 = arith.addf %737, %742 : vector<8x8xf32>
    %756 = arith.addf %747, %752 : vector<8x8xf32>
    %757 = arith.addf %753, %754 : vector<8x8xf32>
    %758 = arith.addf %755, %756 : vector<8x8xf32>
    %759 = arith.addf %757, %758 : vector<8x8xf32>
    %760 = vector.extract_strided_slice %144 {offsets = [0, 0], sizes = [8, 1], strides = [1, 1]} : vector<8x8xf32> to vector<8x1xf32>
    %761 = vector.extract_strided_slice %617 {offsets = [0, 0], sizes = [1, 8], strides = [1, 1]} : vector<8x8xf32> to vector<1x8xf32>
    %762 = vector.broadcast %760 : vector<8x1xf32> to vector<8x8xf32>
    %763 = vector.broadcast %761 : vector<1x8xf32> to vector<8x8xf32>
    %764 = arith.mulf %762, %763 : vector<8x8xf32>
    %765 = vector.extract_strided_slice %144 {offsets = [0, 1], sizes = [8, 1], strides = [1, 1]} : vector<8x8xf32> to vector<8x1xf32>
    %766 = vector.extract_strided_slice %617 {offsets = [1, 0], sizes = [1, 8], strides = [1, 1]} : vector<8x8xf32> to vector<1x8xf32>
    %767 = vector.broadcast %765 : vector<8x1xf32> to vector<8x8xf32>
    %768 = vector.broadcast %766 : vector<1x8xf32> to vector<8x8xf32>
    %769 = arith.mulf %767, %768 : vector<8x8xf32>
    %770 = vector.extract_strided_slice %144 {offsets = [0, 2], sizes = [8, 1], strides = [1, 1]} : vector<8x8xf32> to vector<8x1xf32>
    %771 = vector.extract_strided_slice %617 {offsets = [2, 0], sizes = [1, 8], strides = [1, 1]} : vector<8x8xf32> to vector<1x8xf32>
    %772 = vector.broadcast %770 : vector<8x1xf32> to vector<8x8xf32>
    %773 = vector.broadcast %771 : vector<1x8xf32> to vector<8x8xf32>
    %774 = arith.mulf %772, %773 : vector<8x8xf32>
    %775 = vector.extract_strided_slice %144 {offsets = [0, 3], sizes = [8, 1], strides = [1, 1]} : vector<8x8xf32> to vector<8x1xf32>
    %776 = vector.extract_strided_slice %617 {offsets = [3, 0], sizes = [1, 8], strides = [1, 1]} : vector<8x8xf32> to vector<1x8xf32>
    %777 = vector.broadcast %775 : vector<8x1xf32> to vector<8x8xf32>
    %778 = vector.broadcast %776 : vector<1x8xf32> to vector<8x8xf32>
    %779 = arith.mulf %777, %778 : vector<8x8xf32>
    %780 = vector.extract_strided_slice %144 {offsets = [0, 4], sizes = [8, 1], strides = [1, 1]} : vector<8x8xf32> to vector<8x1xf32>
    %781 = vector.extract_strided_slice %617 {offsets = [4, 0], sizes = [1, 8], strides = [1, 1]} : vector<8x8xf32> to vector<1x8xf32>
    %782 = vector.broadcast %780 : vector<8x1xf32> to vector<8x8xf32>
    %783 = vector.broadcast %781 : vector<1x8xf32> to vector<8x8xf32>
    %784 = arith.mulf %782, %783 : vector<8x8xf32>
    %785 = vector.extract_strided_slice %144 {offsets = [0, 5], sizes = [8, 1], strides = [1, 1]} : vector<8x8xf32> to vector<8x1xf32>
    %786 = vector.extract_strided_slice %617 {offsets = [5, 0], sizes = [1, 8], strides = [1, 1]} : vector<8x8xf32> to vector<1x8xf32>
    %787 = vector.broadcast %785 : vector<8x1xf32> to vector<8x8xf32>
    %788 = vector.broadcast %786 : vector<1x8xf32> to vector<8x8xf32>
    %789 = arith.mulf %787, %788 : vector<8x8xf32>
    %790 = vector.extract_strided_slice %144 {offsets = [0, 6], sizes = [8, 1], strides = [1, 1]} : vector<8x8xf32> to vector<8x1xf32>
    %791 = vector.extract_strided_slice %617 {offsets = [6, 0], sizes = [1, 8], strides = [1, 1]} : vector<8x8xf32> to vector<1x8xf32>
    %792 = vector.broadcast %790 : vector<8x1xf32> to vector<8x8xf32>
    %793 = vector.broadcast %791 : vector<1x8xf32> to vector<8x8xf32>
    %794 = arith.mulf %792, %793 : vector<8x8xf32>
    %795 = vector.extract_strided_slice %144 {offsets = [0, 7], sizes = [8, 1], strides = [1, 1]} : vector<8x8xf32> to vector<8x1xf32>
    %796 = vector.extract_strided_slice %617 {offsets = [7, 0], sizes = [1, 8], strides = [1, 1]} : vector<8x8xf32> to vector<1x8xf32>
    %797 = vector.broadcast %795 : vector<8x1xf32> to vector<8x8xf32>
    %798 = vector.broadcast %796 : vector<1x8xf32> to vector<8x8xf32>
    %799 = arith.mulf %797, %798 : vector<8x8xf32>
    %800 = arith.addf %764, %769 : vector<8x8xf32>
    %801 = arith.addf %774, %779 : vector<8x8xf32>
    %802 = arith.addf %784, %789 : vector<8x8xf32>
    %803 = arith.addf %794, %799 : vector<8x8xf32>
    %804 = arith.addf %800, %801 : vector<8x8xf32>
    %805 = arith.addf %802, %803 : vector<8x8xf32>
    %806 = arith.addf %804, %805 : vector<8x8xf32>
    %807 = vector.extract_strided_slice %617 {offsets = [0, 0], sizes = [8, 1], strides = [1, 1]} : vector<8x8xf32> to vector<8x1xf32>
    %808 = vector.extract_strided_slice %806 {offsets = [0, 0], sizes = [1, 8], strides = [1, 1]} : vector<8x8xf32> to vector<1x8xf32>
    %809 = vector.broadcast %807 : vector<8x1xf32> to vector<8x8xf32>
    %810 = vector.broadcast %808 : vector<1x8xf32> to vector<8x8xf32>
    %811 = arith.mulf %809, %810 : vector<8x8xf32>
    %812 = vector.extract_strided_slice %617 {offsets = [0, 1], sizes = [8, 1], strides = [1, 1]} : vector<8x8xf32> to vector<8x1xf32>
    %813 = vector.extract_strided_slice %806 {offsets = [1, 0], sizes = [1, 8], strides = [1, 1]} : vector<8x8xf32> to vector<1x8xf32>
    %814 = vector.broadcast %812 : vector<8x1xf32> to vector<8x8xf32>
    %815 = vector.broadcast %813 : vector<1x8xf32> to vector<8x8xf32>
    %816 = arith.mulf %814, %815 : vector<8x8xf32>
    %817 = vector.extract_strided_slice %617 {offsets = [0, 2], sizes = [8, 1], strides = [1, 1]} : vector<8x8xf32> to vector<8x1xf32>
    %818 = vector.extract_strided_slice %806 {offsets = [2, 0], sizes = [1, 8], strides = [1, 1]} : vector<8x8xf32> to vector<1x8xf32>
    %819 = vector.broadcast %817 : vector<8x1xf32> to vector<8x8xf32>
    %820 = vector.broadcast %818 : vector<1x8xf32> to vector<8x8xf32>
    %821 = arith.mulf %819, %820 : vector<8x8xf32>
    %822 = vector.extract_strided_slice %617 {offsets = [0, 3], sizes = [8, 1], strides = [1, 1]} : vector<8x8xf32> to vector<8x1xf32>
    %823 = vector.extract_strided_slice %806 {offsets = [3, 0], sizes = [1, 8], strides = [1, 1]} : vector<8x8xf32> to vector<1x8xf32>
    %824 = vector.broadcast %822 : vector<8x1xf32> to vector<8x8xf32>
    %825 = vector.broadcast %823 : vector<1x8xf32> to vector<8x8xf32>
    %826 = arith.mulf %824, %825 : vector<8x8xf32>
    %827 = vector.extract_strided_slice %617 {offsets = [0, 4], sizes = [8, 1], strides = [1, 1]} : vector<8x8xf32> to vector<8x1xf32>
    %828 = vector.extract_strided_slice %806 {offsets = [4, 0], sizes = [1, 8], strides = [1, 1]} : vector<8x8xf32> to vector<1x8xf32>
    %829 = vector.broadcast %827 : vector<8x1xf32> to vector<8x8xf32>
    %830 = vector.broadcast %828 : vector<1x8xf32> to vector<8x8xf32>
    %831 = arith.mulf %829, %830 : vector<8x8xf32>
    %832 = vector.extract_strided_slice %617 {offsets = [0, 5], sizes = [8, 1], strides = [1, 1]} : vector<8x8xf32> to vector<8x1xf32>
    %833 = vector.extract_strided_slice %806 {offsets = [5, 0], sizes = [1, 8], strides = [1, 1]} : vector<8x8xf32> to vector<1x8xf32>
    %834 = vector.broadcast %832 : vector<8x1xf32> to vector<8x8xf32>
    %835 = vector.broadcast %833 : vector<1x8xf32> to vector<8x8xf32>
    %836 = arith.mulf %834, %835 : vector<8x8xf32>
    %837 = vector.extract_strided_slice %617 {offsets = [0, 6], sizes = [8, 1], strides = [1, 1]} : vector<8x8xf32> to vector<8x1xf32>
    %838 = vector.extract_strided_slice %806 {offsets = [6, 0], sizes = [1, 8], strides = [1, 1]} : vector<8x8xf32> to vector<1x8xf32>
    %839 = vector.broadcast %837 : vector<8x1xf32> to vector<8x8xf32>
    %840 = vector.broadcast %838 : vector<1x8xf32> to vector<8x8xf32>
    %841 = arith.mulf %839, %840 : vector<8x8xf32>
    %842 = vector.extract_strided_slice %617 {offsets = [0, 7], sizes = [8, 1], strides = [1, 1]} : vector<8x8xf32> to vector<8x1xf32>
    %843 = vector.extract_strided_slice %806 {offsets = [7, 0], sizes = [1, 8], strides = [1, 1]} : vector<8x8xf32> to vector<1x8xf32>
    %844 = vector.broadcast %842 : vector<8x1xf32> to vector<8x8xf32>
    %845 = vector.broadcast %843 : vector<1x8xf32> to vector<8x8xf32>
    %846 = arith.mulf %844, %845 : vector<8x8xf32>
    %847 = arith.addf %811, %816 : vector<8x8xf32>
    %848 = arith.addf %821, %826 : vector<8x8xf32>
    %849 = arith.addf %831, %836 : vector<8x8xf32>
    %850 = arith.addf %841, %846 : vector<8x8xf32>
    %851 = arith.addf %847, %848 : vector<8x8xf32>
    %852 = arith.addf %849, %850 : vector<8x8xf32>
    %853 = arith.addf %851, %852 : vector<8x8xf32>
    %854 = arith.addf %570, %853 : vector<8x8xf32>
    %855 = vector.extract_strided_slice %617 {offsets = [0, 0], sizes = [8, 1], strides = [1, 1]} : vector<8x8xf32> to vector<8x1xf32>
    %856 = vector.extract_strided_slice %191 {offsets = [0, 0], sizes = [1, 8], strides = [1, 1]} : vector<8x8xf32> to vector<1x8xf32>
    %857 = vector.broadcast %855 : vector<8x1xf32> to vector<8x8xf32>
    %858 = vector.broadcast %856 : vector<1x8xf32> to vector<8x8xf32>
    %859 = arith.mulf %857, %858 : vector<8x8xf32>
    %860 = vector.extract_strided_slice %617 {offsets = [0, 1], sizes = [8, 1], strides = [1, 1]} : vector<8x8xf32> to vector<8x1xf32>
    %861 = vector.extract_strided_slice %191 {offsets = [1, 0], sizes = [1, 8], strides = [1, 1]} : vector<8x8xf32> to vector<1x8xf32>
    %862 = vector.broadcast %860 : vector<8x1xf32> to vector<8x8xf32>
    %863 = vector.broadcast %861 : vector<1x8xf32> to vector<8x8xf32>
    %864 = arith.mulf %862, %863 : vector<8x8xf32>
    %865 = vector.extract_strided_slice %617 {offsets = [0, 2], sizes = [8, 1], strides = [1, 1]} : vector<8x8xf32> to vector<8x1xf32>
    %866 = vector.extract_strided_slice %191 {offsets = [2, 0], sizes = [1, 8], strides = [1, 1]} : vector<8x8xf32> to vector<1x8xf32>
    %867 = vector.broadcast %865 : vector<8x1xf32> to vector<8x8xf32>
    %868 = vector.broadcast %866 : vector<1x8xf32> to vector<8x8xf32>
    %869 = arith.mulf %867, %868 : vector<8x8xf32>
    %870 = vector.extract_strided_slice %617 {offsets = [0, 3], sizes = [8, 1], strides = [1, 1]} : vector<8x8xf32> to vector<8x1xf32>
    %871 = vector.extract_strided_slice %191 {offsets = [3, 0], sizes = [1, 8], strides = [1, 1]} : vector<8x8xf32> to vector<1x8xf32>
    %872 = vector.broadcast %870 : vector<8x1xf32> to vector<8x8xf32>
    %873 = vector.broadcast %871 : vector<1x8xf32> to vector<8x8xf32>
    %874 = arith.mulf %872, %873 : vector<8x8xf32>
    %875 = vector.extract_strided_slice %617 {offsets = [0, 4], sizes = [8, 1], strides = [1, 1]} : vector<8x8xf32> to vector<8x1xf32>
    %876 = vector.extract_strided_slice %191 {offsets = [4, 0], sizes = [1, 8], strides = [1, 1]} : vector<8x8xf32> to vector<1x8xf32>
    %877 = vector.broadcast %875 : vector<8x1xf32> to vector<8x8xf32>
    %878 = vector.broadcast %876 : vector<1x8xf32> to vector<8x8xf32>
    %879 = arith.mulf %877, %878 : vector<8x8xf32>
    %880 = vector.extract_strided_slice %617 {offsets = [0, 5], sizes = [8, 1], strides = [1, 1]} : vector<8x8xf32> to vector<8x1xf32>
    %881 = vector.extract_strided_slice %191 {offsets = [5, 0], sizes = [1, 8], strides = [1, 1]} : vector<8x8xf32> to vector<1x8xf32>
    %882 = vector.broadcast %880 : vector<8x1xf32> to vector<8x8xf32>
    %883 = vector.broadcast %881 : vector<1x8xf32> to vector<8x8xf32>
    %884 = arith.mulf %882, %883 : vector<8x8xf32>
    %885 = vector.extract_strided_slice %617 {offsets = [0, 6], sizes = [8, 1], strides = [1, 1]} : vector<8x8xf32> to vector<8x1xf32>
    %886 = vector.extract_strided_slice %191 {offsets = [6, 0], sizes = [1, 8], strides = [1, 1]} : vector<8x8xf32> to vector<1x8xf32>
    %887 = vector.broadcast %885 : vector<8x1xf32> to vector<8x8xf32>
    %888 = vector.broadcast %886 : vector<1x8xf32> to vector<8x8xf32>
    %889 = arith.mulf %887, %888 : vector<8x8xf32>
    %890 = vector.extract_strided_slice %617 {offsets = [0, 7], sizes = [8, 1], strides = [1, 1]} : vector<8x8xf32> to vector<8x1xf32>
    %891 = vector.extract_strided_slice %191 {offsets = [7, 0], sizes = [1, 8], strides = [1, 1]} : vector<8x8xf32> to vector<1x8xf32>
    %892 = vector.broadcast %890 : vector<8x1xf32> to vector<8x8xf32>
    %893 = vector.broadcast %891 : vector<1x8xf32> to vector<8x8xf32>
    %894 = arith.mulf %892, %893 : vector<8x8xf32>
    %895 = arith.addf %859, %864 : vector<8x8xf32>
    %896 = arith.addf %869, %874 : vector<8x8xf32>
    %897 = arith.addf %879, %884 : vector<8x8xf32>
    %898 = arith.addf %889, %894 : vector<8x8xf32>
    %899 = arith.addf %895, %896 : vector<8x8xf32>
    %900 = arith.addf %897, %898 : vector<8x8xf32>
    %901 = arith.addf %899, %900 : vector<8x8xf32>
    %902 = vector.extract_strided_slice %854 {offsets = [0, 0], sizes = [8, 1], strides = [1, 1]} : vector<8x8xf32> to vector<8x1xf32>
    %903 = vector.extract_strided_slice %759 {offsets = [0, 0], sizes = [1, 8], strides = [1, 1]} : vector<8x8xf32> to vector<1x8xf32>
    %904 = vector.broadcast %902 : vector<8x1xf32> to vector<8x8xf32>
    %905 = vector.broadcast %903 : vector<1x8xf32> to vector<8x8xf32>
    %906 = arith.mulf %904, %905 : vector<8x8xf32>
    %907 = vector.extract_strided_slice %854 {offsets = [0, 1], sizes = [8, 1], strides = [1, 1]} : vector<8x8xf32> to vector<8x1xf32>
    %908 = vector.extract_strided_slice %759 {offsets = [1, 0], sizes = [1, 8], strides = [1, 1]} : vector<8x8xf32> to vector<1x8xf32>
    %909 = vector.broadcast %907 : vector<8x1xf32> to vector<8x8xf32>
    %910 = vector.broadcast %908 : vector<1x8xf32> to vector<8x8xf32>
    %911 = arith.mulf %909, %910 : vector<8x8xf32>
    %912 = vector.extract_strided_slice %854 {offsets = [0, 2], sizes = [8, 1], strides = [1, 1]} : vector<8x8xf32> to vector<8x1xf32>
    %913 = vector.extract_strided_slice %759 {offsets = [2, 0], sizes = [1, 8], strides = [1, 1]} : vector<8x8xf32> to vector<1x8xf32>
    %914 = vector.broadcast %912 : vector<8x1xf32> to vector<8x8xf32>
    %915 = vector.broadcast %913 : vector<1x8xf32> to vector<8x8xf32>
    %916 = arith.mulf %914, %915 : vector<8x8xf32>
    %917 = vector.extract_strided_slice %854 {offsets = [0, 3], sizes = [8, 1], strides = [1, 1]} : vector<8x8xf32> to vector<8x1xf32>
    %918 = vector.extract_strided_slice %759 {offsets = [3, 0], sizes = [1, 8], strides = [1, 1]} : vector<8x8xf32> to vector<1x8xf32>
    %919 = vector.broadcast %917 : vector<8x1xf32> to vector<8x8xf32>
    %920 = vector.broadcast %918 : vector<1x8xf32> to vector<8x8xf32>
    %921 = arith.mulf %919, %920 : vector<8x8xf32>
    %922 = vector.extract_strided_slice %854 {offsets = [0, 4], sizes = [8, 1], strides = [1, 1]} : vector<8x8xf32> to vector<8x1xf32>
    %923 = vector.extract_strided_slice %759 {offsets = [4, 0], sizes = [1, 8], strides = [1, 1]} : vector<8x8xf32> to vector<1x8xf32>
    %924 = vector.broadcast %922 : vector<8x1xf32> to vector<8x8xf32>
    %925 = vector.broadcast %923 : vector<1x8xf32> to vector<8x8xf32>
    %926 = arith.mulf %924, %925 : vector<8x8xf32>
    %927 = vector.extract_strided_slice %854 {offsets = [0, 5], sizes = [8, 1], strides = [1, 1]} : vector<8x8xf32> to vector<8x1xf32>
    %928 = vector.extract_strided_slice %759 {offsets = [5, 0], sizes = [1, 8], strides = [1, 1]} : vector<8x8xf32> to vector<1x8xf32>
    %929 = vector.broadcast %927 : vector<8x1xf32> to vector<8x8xf32>
    %930 = vector.broadcast %928 : vector<1x8xf32> to vector<8x8xf32>
    %931 = arith.mulf %929, %930 : vector<8x8xf32>
    %932 = vector.extract_strided_slice %854 {offsets = [0, 6], sizes = [8, 1], strides = [1, 1]} : vector<8x8xf32> to vector<8x1xf32>
    %933 = vector.extract_strided_slice %759 {offsets = [6, 0], sizes = [1, 8], strides = [1, 1]} : vector<8x8xf32> to vector<1x8xf32>
    %934 = vector.broadcast %932 : vector<8x1xf32> to vector<8x8xf32>
    %935 = vector.broadcast %933 : vector<1x8xf32> to vector<8x8xf32>
    %936 = arith.mulf %934, %935 : vector<8x8xf32>
    %937 = vector.extract_strided_slice %854 {offsets = [0, 7], sizes = [8, 1], strides = [1, 1]} : vector<8x8xf32> to vector<8x1xf32>
    %938 = vector.extract_strided_slice %759 {offsets = [7, 0], sizes = [1, 8], strides = [1, 1]} : vector<8x8xf32> to vector<1x8xf32>
    %939 = vector.broadcast %937 : vector<8x1xf32> to vector<8x8xf32>
    %940 = vector.broadcast %938 : vector<1x8xf32> to vector<8x8xf32>
    %941 = arith.mulf %939, %940 : vector<8x8xf32>
    %942 = arith.addf %906, %911 : vector<8x8xf32>
    %943 = arith.addf %916, %921 : vector<8x8xf32>
    %944 = arith.addf %926, %931 : vector<8x8xf32>
    %945 = arith.addf %936, %941 : vector<8x8xf32>
    %946 = arith.addf %942, %943 : vector<8x8xf32>
    %947 = arith.addf %944, %945 : vector<8x8xf32>
    %948 = arith.addf %946, %947 : vector<8x8xf32>
    %949 = vector.extract_strided_slice %759 {offsets = [0, 0], sizes = [8, 1], strides = [1, 1]} : vector<8x8xf32> to vector<8x1xf32>
    %950 = vector.extract_strided_slice %948 {offsets = [0, 0], sizes = [1, 8], strides = [1, 1]} : vector<8x8xf32> to vector<1x8xf32>
    %951 = vector.broadcast %949 : vector<8x1xf32> to vector<8x8xf32>
    %952 = vector.broadcast %950 : vector<1x8xf32> to vector<8x8xf32>
    %953 = arith.mulf %951, %952 : vector<8x8xf32>
    %954 = vector.extract_strided_slice %759 {offsets = [0, 1], sizes = [8, 1], strides = [1, 1]} : vector<8x8xf32> to vector<8x1xf32>
    %955 = vector.extract_strided_slice %948 {offsets = [1, 0], sizes = [1, 8], strides = [1, 1]} : vector<8x8xf32> to vector<1x8xf32>
    %956 = vector.broadcast %954 : vector<8x1xf32> to vector<8x8xf32>
    %957 = vector.broadcast %955 : vector<1x8xf32> to vector<8x8xf32>
    %958 = arith.mulf %956, %957 : vector<8x8xf32>
    %959 = vector.extract_strided_slice %759 {offsets = [0, 2], sizes = [8, 1], strides = [1, 1]} : vector<8x8xf32> to vector<8x1xf32>
    %960 = vector.extract_strided_slice %948 {offsets = [2, 0], sizes = [1, 8], strides = [1, 1]} : vector<8x8xf32> to vector<1x8xf32>
    %961 = vector.broadcast %959 : vector<8x1xf32> to vector<8x8xf32>
    %962 = vector.broadcast %960 : vector<1x8xf32> to vector<8x8xf32>
    %963 = arith.mulf %961, %962 : vector<8x8xf32>
    %964 = vector.extract_strided_slice %759 {offsets = [0, 3], sizes = [8, 1], strides = [1, 1]} : vector<8x8xf32> to vector<8x1xf32>
    %965 = vector.extract_strided_slice %948 {offsets = [3, 0], sizes = [1, 8], strides = [1, 1]} : vector<8x8xf32> to vector<1x8xf32>
    %966 = vector.broadcast %964 : vector<8x1xf32> to vector<8x8xf32>
    %967 = vector.broadcast %965 : vector<1x8xf32> to vector<8x8xf32>
    %968 = arith.mulf %966, %967 : vector<8x8xf32>
    %969 = vector.extract_strided_slice %759 {offsets = [0, 4], sizes = [8, 1], strides = [1, 1]} : vector<8x8xf32> to vector<8x1xf32>
    %970 = vector.extract_strided_slice %948 {offsets = [4, 0], sizes = [1, 8], strides = [1, 1]} : vector<8x8xf32> to vector<1x8xf32>
    %971 = vector.broadcast %969 : vector<8x1xf32> to vector<8x8xf32>
    %972 = vector.broadcast %970 : vector<1x8xf32> to vector<8x8xf32>
    %973 = arith.mulf %971, %972 : vector<8x8xf32>
    %974 = vector.extract_strided_slice %759 {offsets = [0, 5], sizes = [8, 1], strides = [1, 1]} : vector<8x8xf32> to vector<8x1xf32>
    %975 = vector.extract_strided_slice %948 {offsets = [5, 0], sizes = [1, 8], strides = [1, 1]} : vector<8x8xf32> to vector<1x8xf32>
    %976 = vector.broadcast %974 : vector<8x1xf32> to vector<8x8xf32>
    %977 = vector.broadcast %975 : vector<1x8xf32> to vector<8x8xf32>
    %978 = arith.mulf %976, %977 : vector<8x8xf32>
    %979 = vector.extract_strided_slice %759 {offsets = [0, 6], sizes = [8, 1], strides = [1, 1]} : vector<8x8xf32> to vector<8x1xf32>
    %980 = vector.extract_strided_slice %948 {offsets = [6, 0], sizes = [1, 8], strides = [1, 1]} : vector<8x8xf32> to vector<1x8xf32>
    %981 = vector.broadcast %979 : vector<8x1xf32> to vector<8x8xf32>
    %982 = vector.broadcast %980 : vector<1x8xf32> to vector<8x8xf32>
    %983 = arith.mulf %981, %982 : vector<8x8xf32>
    %984 = vector.extract_strided_slice %759 {offsets = [0, 7], sizes = [8, 1], strides = [1, 1]} : vector<8x8xf32> to vector<8x1xf32>
    %985 = vector.extract_strided_slice %948 {offsets = [7, 0], sizes = [1, 8], strides = [1, 1]} : vector<8x8xf32> to vector<1x8xf32>
    %986 = vector.broadcast %984 : vector<8x1xf32> to vector<8x8xf32>
    %987 = vector.broadcast %985 : vector<1x8xf32> to vector<8x8xf32>
    %988 = arith.mulf %986, %987 : vector<8x8xf32>
    %989 = arith.addf %953, %958 : vector<8x8xf32>
    %990 = arith.addf %963, %968 : vector<8x8xf32>
    %991 = arith.addf %973, %978 : vector<8x8xf32>
    %992 = arith.addf %983, %988 : vector<8x8xf32>
    %993 = arith.addf %989, %990 : vector<8x8xf32>
    %994 = arith.addf %991, %992 : vector<8x8xf32>
    %995 = arith.addf %993, %994 : vector<8x8xf32>
    %996 = arith.addf %712, %995 : vector<8x8xf32>
    %997 = vector.extract_strided_slice %759 {offsets = [0, 0], sizes = [8, 1], strides = [1, 1]} : vector<8x8xf32> to vector<8x1xf32>
    %998 = vector.extract_strided_slice %901 {offsets = [0, 0], sizes = [1, 8], strides = [1, 1]} : vector<8x8xf32> to vector<1x8xf32>
    %999 = vector.broadcast %997 : vector<8x1xf32> to vector<8x8xf32>
    %1000 = vector.broadcast %998 : vector<1x8xf32> to vector<8x8xf32>
    %1001 = arith.mulf %999, %1000 : vector<8x8xf32>
    %1002 = vector.extract_strided_slice %759 {offsets = [0, 1], sizes = [8, 1], strides = [1, 1]} : vector<8x8xf32> to vector<8x1xf32>
    %1003 = vector.extract_strided_slice %901 {offsets = [1, 0], sizes = [1, 8], strides = [1, 1]} : vector<8x8xf32> to vector<1x8xf32>
    %1004 = vector.broadcast %1002 : vector<8x1xf32> to vector<8x8xf32>
    %1005 = vector.broadcast %1003 : vector<1x8xf32> to vector<8x8xf32>
    %1006 = arith.mulf %1004, %1005 : vector<8x8xf32>
    %1007 = vector.extract_strided_slice %759 {offsets = [0, 2], sizes = [8, 1], strides = [1, 1]} : vector<8x8xf32> to vector<8x1xf32>
    %1008 = vector.extract_strided_slice %901 {offsets = [2, 0], sizes = [1, 8], strides = [1, 1]} : vector<8x8xf32> to vector<1x8xf32>
    %1009 = vector.broadcast %1007 : vector<8x1xf32> to vector<8x8xf32>
    %1010 = vector.broadcast %1008 : vector<1x8xf32> to vector<8x8xf32>
    %1011 = arith.mulf %1009, %1010 : vector<8x8xf32>
    %1012 = vector.extract_strided_slice %759 {offsets = [0, 3], sizes = [8, 1], strides = [1, 1]} : vector<8x8xf32> to vector<8x1xf32>
    %1013 = vector.extract_strided_slice %901 {offsets = [3, 0], sizes = [1, 8], strides = [1, 1]} : vector<8x8xf32> to vector<1x8xf32>
    %1014 = vector.broadcast %1012 : vector<8x1xf32> to vector<8x8xf32>
    %1015 = vector.broadcast %1013 : vector<1x8xf32> to vector<8x8xf32>
    %1016 = arith.mulf %1014, %1015 : vector<8x8xf32>
    %1017 = vector.extract_strided_slice %759 {offsets = [0, 4], sizes = [8, 1], strides = [1, 1]} : vector<8x8xf32> to vector<8x1xf32>
    %1018 = vector.extract_strided_slice %901 {offsets = [4, 0], sizes = [1, 8], strides = [1, 1]} : vector<8x8xf32> to vector<1x8xf32>
    %1019 = vector.broadcast %1017 : vector<8x1xf32> to vector<8x8xf32>
    %1020 = vector.broadcast %1018 : vector<1x8xf32> to vector<8x8xf32>
    %1021 = arith.mulf %1019, %1020 : vector<8x8xf32>
    %1022 = vector.extract_strided_slice %759 {offsets = [0, 5], sizes = [8, 1], strides = [1, 1]} : vector<8x8xf32> to vector<8x1xf32>
    %1023 = vector.extract_strided_slice %901 {offsets = [5, 0], sizes = [1, 8], strides = [1, 1]} : vector<8x8xf32> to vector<1x8xf32>
    %1024 = vector.broadcast %1022 : vector<8x1xf32> to vector<8x8xf32>
    %1025 = vector.broadcast %1023 : vector<1x8xf32> to vector<8x8xf32>
    %1026 = arith.mulf %1024, %1025 : vector<8x8xf32>
    %1027 = vector.extract_strided_slice %759 {offsets = [0, 6], sizes = [8, 1], strides = [1, 1]} : vector<8x8xf32> to vector<8x1xf32>
    %1028 = vector.extract_strided_slice %901 {offsets = [6, 0], sizes = [1, 8], strides = [1, 1]} : vector<8x8xf32> to vector<1x8xf32>
    %1029 = vector.broadcast %1027 : vector<8x1xf32> to vector<8x8xf32>
    %1030 = vector.broadcast %1028 : vector<1x8xf32> to vector<8x8xf32>
    %1031 = arith.mulf %1029, %1030 : vector<8x8xf32>
    %1032 = vector.extract_strided_slice %759 {offsets = [0, 7], sizes = [8, 1], strides = [1, 1]} : vector<8x8xf32> to vector<8x1xf32>
    %1033 = vector.extract_strided_slice %901 {offsets = [7, 0], sizes = [1, 8], strides = [1, 1]} : vector<8x8xf32> to vector<1x8xf32>
    %1034 = vector.broadcast %1032 : vector<8x1xf32> to vector<8x8xf32>
    %1035 = vector.broadcast %1033 : vector<1x8xf32> to vector<8x8xf32>
    %1036 = arith.mulf %1034, %1035 : vector<8x8xf32>
    %1037 = arith.addf %1001, %1006 : vector<8x8xf32>
    %1038 = arith.addf %1011, %1016 : vector<8x8xf32>
    %1039 = arith.addf %1021, %1026 : vector<8x8xf32>
    %1040 = arith.addf %1031, %1036 : vector<8x8xf32>
    %1041 = arith.addf %1037, %1038 : vector<8x8xf32>
    %1042 = arith.addf %1039, %1040 : vector<8x8xf32>
    %1043 = arith.addf %1041, %1042 : vector<8x8xf32>
    %1044 = vector.extract_strided_slice %0 {offsets = [0, 0], sizes = [8, 1], strides = [1, 1]} : vector<8x8xf32> to vector<8x1xf32>
    %1045 = vector.extract_strided_slice %1043 {offsets = [0, 0], sizes = [1, 8], strides = [1, 1]} : vector<8x8xf32> to vector<1x8xf32>
    %1046 = vector.broadcast %1044 : vector<8x1xf32> to vector<8x8xf32>
    %1047 = vector.broadcast %1045 : vector<1x8xf32> to vector<8x8xf32>
    %1048 = arith.mulf %1046, %1047 : vector<8x8xf32>
    %1049 = vector.extract_strided_slice %0 {offsets = [0, 1], sizes = [8, 1], strides = [1, 1]} : vector<8x8xf32> to vector<8x1xf32>
    %1050 = vector.extract_strided_slice %1043 {offsets = [1, 0], sizes = [1, 8], strides = [1, 1]} : vector<8x8xf32> to vector<1x8xf32>
    %1051 = vector.broadcast %1049 : vector<8x1xf32> to vector<8x8xf32>
    %1052 = vector.broadcast %1050 : vector<1x8xf32> to vector<8x8xf32>
    %1053 = arith.mulf %1051, %1052 : vector<8x8xf32>
    %1054 = vector.extract_strided_slice %0 {offsets = [0, 2], sizes = [8, 1], strides = [1, 1]} : vector<8x8xf32> to vector<8x1xf32>
    %1055 = vector.extract_strided_slice %1043 {offsets = [2, 0], sizes = [1, 8], strides = [1, 1]} : vector<8x8xf32> to vector<1x8xf32>
    %1056 = vector.broadcast %1054 : vector<8x1xf32> to vector<8x8xf32>
    %1057 = vector.broadcast %1055 : vector<1x8xf32> to vector<8x8xf32>
    %1058 = arith.mulf %1056, %1057 : vector<8x8xf32>
    %1059 = vector.extract_strided_slice %0 {offsets = [0, 3], sizes = [8, 1], strides = [1, 1]} : vector<8x8xf32> to vector<8x1xf32>
    %1060 = vector.extract_strided_slice %1043 {offsets = [3, 0], sizes = [1, 8], strides = [1, 1]} : vector<8x8xf32> to vector<1x8xf32>
    %1061 = vector.broadcast %1059 : vector<8x1xf32> to vector<8x8xf32>
    %1062 = vector.broadcast %1060 : vector<1x8xf32> to vector<8x8xf32>
    %1063 = arith.mulf %1061, %1062 : vector<8x8xf32>
    %1064 = vector.extract_strided_slice %0 {offsets = [0, 4], sizes = [8, 1], strides = [1, 1]} : vector<8x8xf32> to vector<8x1xf32>
    %1065 = vector.extract_strided_slice %1043 {offsets = [4, 0], sizes = [1, 8], strides = [1, 1]} : vector<8x8xf32> to vector<1x8xf32>
    %1066 = vector.broadcast %1064 : vector<8x1xf32> to vector<8x8xf32>
    %1067 = vector.broadcast %1065 : vector<1x8xf32> to vector<8x8xf32>
    %1068 = arith.mulf %1066, %1067 : vector<8x8xf32>
    %1069 = vector.extract_strided_slice %0 {offsets = [0, 5], sizes = [8, 1], strides = [1, 1]} : vector<8x8xf32> to vector<8x1xf32>
    %1070 = vector.extract_strided_slice %1043 {offsets = [5, 0], sizes = [1, 8], strides = [1, 1]} : vector<8x8xf32> to vector<1x8xf32>
    %1071 = vector.broadcast %1069 : vector<8x1xf32> to vector<8x8xf32>
    %1072 = vector.broadcast %1070 : vector<1x8xf32> to vector<8x8xf32>
    %1073 = arith.mulf %1071, %1072 : vector<8x8xf32>
    %1074 = vector.extract_strided_slice %0 {offsets = [0, 6], sizes = [8, 1], strides = [1, 1]} : vector<8x8xf32> to vector<8x1xf32>
    %1075 = vector.extract_strided_slice %1043 {offsets = [6, 0], sizes = [1, 8], strides = [1, 1]} : vector<8x8xf32> to vector<1x8xf32>
    %1076 = vector.broadcast %1074 : vector<8x1xf32> to vector<8x8xf32>
    %1077 = vector.broadcast %1075 : vector<1x8xf32> to vector<8x8xf32>
    %1078 = arith.mulf %1076, %1077 : vector<8x8xf32>
    %1079 = vector.extract_strided_slice %0 {offsets = [0, 7], sizes = [8, 1], strides = [1, 1]} : vector<8x8xf32> to vector<8x1xf32>
    %1080 = vector.extract_strided_slice %1043 {offsets = [7, 0], sizes = [1, 8], strides = [1, 1]} : vector<8x8xf32> to vector<1x8xf32>
    %1081 = vector.broadcast %1079 : vector<8x1xf32> to vector<8x8xf32>
    %1082 = vector.broadcast %1080 : vector<1x8xf32> to vector<8x8xf32>
    %1083 = arith.mulf %1081, %1082 : vector<8x8xf32>
    %1084 = arith.addf %1048, %1053 : vector<8x8xf32>
    %1085 = arith.addf %1058, %1063 : vector<8x8xf32>
    %1086 = arith.addf %1068, %1073 : vector<8x8xf32>
    %1087 = arith.addf %1078, %1083 : vector<8x8xf32>
    %1088 = arith.addf %1084, %1085 : vector<8x8xf32>
    %1089 = arith.addf %1086, %1087 : vector<8x8xf32>
    %1090 = arith.addf %1088, %1089 : vector<8x8xf32>
    %1091 = vector.extract_strided_slice %1043 {offsets = [0, 0], sizes = [8, 1], strides = [1, 1]} : vector<8x8xf32> to vector<8x1xf32>
    %1092 = vector.extract_strided_slice %1090 {offsets = [0, 0], sizes = [1, 8], strides = [1, 1]} : vector<8x8xf32> to vector<1x8xf32>
    %1093 = vector.broadcast %1091 : vector<8x1xf32> to vector<8x8xf32>
    %1094 = vector.broadcast %1092 : vector<1x8xf32> to vector<8x8xf32>
    %1095 = arith.mulf %1093, %1094 : vector<8x8xf32>
    %1096 = vector.extract_strided_slice %1043 {offsets = [0, 1], sizes = [8, 1], strides = [1, 1]} : vector<8x8xf32> to vector<8x1xf32>
    %1097 = vector.extract_strided_slice %1090 {offsets = [1, 0], sizes = [1, 8], strides = [1, 1]} : vector<8x8xf32> to vector<1x8xf32>
    %1098 = vector.broadcast %1096 : vector<8x1xf32> to vector<8x8xf32>
    %1099 = vector.broadcast %1097 : vector<1x8xf32> to vector<8x8xf32>
    %1100 = arith.mulf %1098, %1099 : vector<8x8xf32>
    %1101 = vector.extract_strided_slice %1043 {offsets = [0, 2], sizes = [8, 1], strides = [1, 1]} : vector<8x8xf32> to vector<8x1xf32>
    %1102 = vector.extract_strided_slice %1090 {offsets = [2, 0], sizes = [1, 8], strides = [1, 1]} : vector<8x8xf32> to vector<1x8xf32>
    %1103 = vector.broadcast %1101 : vector<8x1xf32> to vector<8x8xf32>
    %1104 = vector.broadcast %1102 : vector<1x8xf32> to vector<8x8xf32>
    %1105 = arith.mulf %1103, %1104 : vector<8x8xf32>
    %1106 = vector.extract_strided_slice %1043 {offsets = [0, 3], sizes = [8, 1], strides = [1, 1]} : vector<8x8xf32> to vector<8x1xf32>
    %1107 = vector.extract_strided_slice %1090 {offsets = [3, 0], sizes = [1, 8], strides = [1, 1]} : vector<8x8xf32> to vector<1x8xf32>
    %1108 = vector.broadcast %1106 : vector<8x1xf32> to vector<8x8xf32>
    %1109 = vector.broadcast %1107 : vector<1x8xf32> to vector<8x8xf32>
    %1110 = arith.mulf %1108, %1109 : vector<8x8xf32>
    %1111 = vector.extract_strided_slice %1043 {offsets = [0, 4], sizes = [8, 1], strides = [1, 1]} : vector<8x8xf32> to vector<8x1xf32>
    %1112 = vector.extract_strided_slice %1090 {offsets = [4, 0], sizes = [1, 8], strides = [1, 1]} : vector<8x8xf32> to vector<1x8xf32>
    %1113 = vector.broadcast %1111 : vector<8x1xf32> to vector<8x8xf32>
    %1114 = vector.broadcast %1112 : vector<1x8xf32> to vector<8x8xf32>
    %1115 = arith.mulf %1113, %1114 : vector<8x8xf32>
    %1116 = vector.extract_strided_slice %1043 {offsets = [0, 5], sizes = [8, 1], strides = [1, 1]} : vector<8x8xf32> to vector<8x1xf32>
    %1117 = vector.extract_strided_slice %1090 {offsets = [5, 0], sizes = [1, 8], strides = [1, 1]} : vector<8x8xf32> to vector<1x8xf32>
    %1118 = vector.broadcast %1116 : vector<8x1xf32> to vector<8x8xf32>
    %1119 = vector.broadcast %1117 : vector<1x8xf32> to vector<8x8xf32>
    %1120 = arith.mulf %1118, %1119 : vector<8x8xf32>
    %1121 = vector.extract_strided_slice %1043 {offsets = [0, 6], sizes = [8, 1], strides = [1, 1]} : vector<8x8xf32> to vector<8x1xf32>
    %1122 = vector.extract_strided_slice %1090 {offsets = [6, 0], sizes = [1, 8], strides = [1, 1]} : vector<8x8xf32> to vector<1x8xf32>
    %1123 = vector.broadcast %1121 : vector<8x1xf32> to vector<8x8xf32>
    %1124 = vector.broadcast %1122 : vector<1x8xf32> to vector<8x8xf32>
    %1125 = arith.mulf %1123, %1124 : vector<8x8xf32>
    %1126 = vector.extract_strided_slice %1043 {offsets = [0, 7], sizes = [8, 1], strides = [1, 1]} : vector<8x8xf32> to vector<8x1xf32>
    %1127 = vector.extract_strided_slice %1090 {offsets = [7, 0], sizes = [1, 8], strides = [1, 1]} : vector<8x8xf32> to vector<1x8xf32>
    %1128 = vector.broadcast %1126 : vector<8x1xf32> to vector<8x8xf32>
    %1129 = vector.broadcast %1127 : vector<1x8xf32> to vector<8x8xf32>
    %1130 = arith.mulf %1128, %1129 : vector<8x8xf32>
    %1131 = arith.addf %1095, %1100 : vector<8x8xf32>
    %1132 = arith.addf %1105, %1110 : vector<8x8xf32>
    %1133 = arith.addf %1115, %1120 : vector<8x8xf32>
    %1134 = arith.addf %1125, %1130 : vector<8x8xf32>
    %1135 = arith.addf %1131, %1132 : vector<8x8xf32>
    %1136 = arith.addf %1133, %1134 : vector<8x8xf32>
    %1137 = arith.addf %1135, %1136 : vector<8x8xf32>
    %1138 = arith.addf %996, %1137 : vector<8x8xf32>
    %1139 = arith.addf %1138, %0 : vector<8x8xf32>
    %c0_3 = arith.constant 0 : index
    %c0_4 = arith.constant 0 : index
    %1140 = vector.load %arg2[%c0_3, %c0_4] : memref<8x8xf32, #tpu.memory_space<vmem>>, vector<8x8xf32>
    tpu.vector_store %arg2[%c0_3, %c0_4], %1139 {strides = array<i32>} : memref<8x8xf32, #tpu.memory_space<vmem>>, vector<8x8xf32>,
    return
  }
}

</mosaic_0001>

<llo_original>
// kernel: model_forward.1
$region0: #{model_forward.1}
  #allocation0 [shape = 'u32[]', space=smem, size = 0x4, offset = 0x4, fixed_abs, tag = 'smem constant byte address 0x4 - core index']
  #allocation1 [shape = 'u32[144,128]{1,0:T(1,128)}', space=vmem, size = 0x12000, scoped, tag = 'internal scratch']
  %s0 = inlined_call_operand.hbm [shape: f32[8,8], index: 0, kind: input, shape index: {}]
  %s1 = inlined_call_operand.hbm [shape: f32[8,8], index: 1, kind: input, shape index: {}]
  %s2 = inlined_call_operand.hbm [shape: f32[8,8], index: 2, kind: output, shape index: {}]
  %s3 = sld [smem:[#allocation0]]
  $region26: #{model_forward.1} parent=0
    _
  %s5 = ssub.s32 1, %s3
  %s6 = scalar_select 0, %s5, %s3
  $region1: #{model_forward.1} parent=0
    #allocation2 [shape = 'u8[4096]{0}', space=vmem, size = 0x1000, scoped, tag = 'input window, operand 0, single buffered']
    #allocation3 [shape = 's32[1]{0}', space=sflag, size = 0x4, scoped, tag = 'scoped memory for model_forward.1']
    #allocation4 [shape = 's32[1]{0}', space=sflag, size = 0x4, scoped, tag = 'scoped memory for model_forward.1']
    #allocation5 [shape = 'u8[4096]{0}', space=vmem, size = 0x1000, scoped, tag = 'input window, operand 1, single buffered']
    #allocation6 [shape = 's32[1]{0}', space=sflag, size = 0x4, scoped, tag = 'scoped memory for model_forward.1']
    #allocation7 [shape = 'u8[4096]{0}', space=vmem, size = 0x1000, scoped, tag = 'output window, operand 0, single buffered']
    %7 = vsyncpa [#allocation3], 0
    %8 = vsyncpa [#allocation6], 0
    %9 = vsyncpa [#allocation4], 0
    // Predicated region
    $region2: #{model_forward.1} parent=1 // pred_check
      _
    $region3: #{model_forward.1} parent=1 // pred_check_branch
      %11 = sbr.rel (0) target = $region5
    $region4: #{model_forward.1} parent=1 // pred_region
      %s13 = ssub.s32 128, 128
      %14 = vsyncadd [#allocation3], %s13
      %s16 = sshll.u32 [#allocation2], 4
      %s17 = int_to_ptr.vmem [resolvable:$true] %s16
      %19 = dma.hbm_to_vmem [thread:$0]  %s0, 128, %s17, [#allocation3]
    $region5: #{model_forward.1} parent=1 // pred_fallthru
      _
    // Predicated region
    $region6: #{model_forward.1} parent=1 // pred_check
      _
    $region7: #{model_forward.1} parent=1 // pred_check_branch
      %21 = sbr.rel (0) target = $region9
    $region8: #{model_forward.1} parent=1 // pred_region
      %s23 = ssub.s32 128, 128
      %24 = vsyncadd [#allocation6], %s23
      %s26 = sshll.u32 [#allocation5], 4
      %s27 = int_to_ptr.vmem [resolvable:$true] %s26
      %29 = dma.hbm_to_vmem [thread:$0]  %s1, 128, %s27, [#allocation6]
    $region9: #{model_forward.1} parent=1 // pred_fallthru
      _
    // Predicated region
    $region10: #{model_forward.1} parent=1 // pred_check
      _
    $region11: #{model_forward.1} parent=1 // pred_check_branch
      %31 = sbr.rel (0) target = $region13
    $region12: #{model_forward.1} parent=1 // pred_region
      %32 = dma.done [#allocation3], 128
    $region13: #{model_forward.1} parent=1 // pred_fallthru
      _
    // Predicated region
    $region14: #{model_forward.1} parent=1 // pred_check
      _
    $region15: #{model_forward.1} parent=1 // pred_check_branch
      %34 = sbr.rel (0) target = $region17
    $region16: #{model_forward.1} parent=1 // pred_region
      %35 = dma.done [#allocation6], 128
    $region17: #{model_forward.1} parent=1 // pred_fallthru
      _
    %v36 = vld [vmem:[#allocation2] sm:$0xff]
    %v37 = vld [vmem:[#allocation5] sm:$0xff]
    %39 = vset.pattern.permute.xlu0 0
    %40 = vperm.xlu0 %39, %v36
    %v41 = vpop.permute.xlu0 %40
    %v43 = vlaneseq
    %v44 = vshrl.u32 %v43, 7
    %v45 = vsub.s32 0, %v44
    %v46 = vrot.slane %v37, %v45
    %v47 = vmul.f32 %v41, %v46
    %48 = vset.pattern.permute.xlu0 1
    %49 = vperm.xlu0 %48, %v36
    %v50 = vpop.permute.xlu0 %49
    %v52 = vlaneseq
    %v53 = vshrl.u32 %v52, 7
    %v54 = vsub.s32 1, %v53
    %v55 = vrot.slane %v37, %v54
    %v56 = vmul.f32 %v50, %v55
    %57 = vset.pattern.permute.xlu0 2
    %58 = vperm.xlu0 %57, %v36
    %v59 = vpop.permute.xlu0 %58
    %v61 = vlaneseq
    %v62 = vshrl.u32 %v61, 7
    %v63 = vsub.s32 2, %v62
    %v64 = vrot.slane %v37, %v63
    %v65 = vmul.f32 %v59, %v64
    %66 = vset.pattern.permute.xlu0 3
    %67 = vperm.xlu0 %66, %v36
    %v68 = vpop.permute.xlu0 %67
    %v70 = vlaneseq
    %v71 = vshrl.u32 %v70, 7
    %v72 = vsub.s32 3, %v71
    %v73 = vrot.slane %v37, %v72
    %v74 = vmul.f32 %v68, %v73
    %75 = vset.pattern.permute.xlu0 4
    %76 = vperm.xlu0 %75, %v36
    %v77 = vpop.permute.xlu0 %76
    %v79 = vlaneseq
    %v80 = vshrl.u32 %v79, 7
    %v81 = vsub.s32 4, %v80
    %v82 = vrot.slane %v37, %v81
    %v83 = vmul.f32 %v77, %v82
    %84 = vset.pattern.permute.xlu0 5
    %85 = vperm.xlu0 %84, %v36
    %v86 = vpop.permute.xlu0 %85
    %v88 = vlaneseq
    %v89 = vshrl.u32 %v88, 7
    %v90 = vsub.s32 5, %v89
    %v91 = vrot.slane %v37, %v90
    %v92 = vmul.f32 %v86, %v91
    %93 = vset.pattern.permute.xlu0 6
    %94 = vperm.xlu0 %93, %v36
    %v95 = vpop.permute.xlu0 %94
    %v97 = vlaneseq
    %v98 = vshrl.u32 %v97, 7
    %v99 = vsub.s32 6, %v98
    %v100 = vrot.slane %v37, %v99
    %v101 = vmul.f32 %v95, %v100
    %102 = vset.pattern.permute.xlu0 7
    %103 = vperm.xlu0 %102, %v36
    %v104 = vpop.permute.xlu0 %103
    %v106 = vlaneseq
    %v107 = vshrl.u32 %v106, 7
    %v108 = vsub.s32 7, %v107
    %v109 = vrot.slane %v37, %v108
    %v110 = vmul.f32 %v104, %v109
    %v111 = vadd.f32 %v47, %v56
    %v112 = vadd.f32 %v65, %v74
    %v113 = vadd.f32 %v83, %v92
    %v114 = vadd.f32 %v101, %v110
    %v115 = vadd.f32 %v111, %v112
    %v116 = vadd.f32 %v113, %v114
    %v117 = vadd.f32 %v115, %v116
    %v118 = vadd.f32 %v36, %v117
    %120 = vset.pattern.permute.xlu0 0
    %121 = vperm.xlu0 %120, %v118
    %v122 = vpop.permute.xlu0 %121
    %v124 = vmul.f32 %v122, %v46
    %125 = vset.pattern.permute.xlu0 1
    %126 = vperm.xlu0 %125, %v118
    %v127 = vpop.permute.xlu0 %126
    %v129 = vmul.f32 %v127, %v55
    %130 = vset.pattern.permute.xlu0 2
    %131 = vperm.xlu0 %130, %v118
    %v132 = vpop.permute.xlu0 %131
    %v134 = vmul.f32 %v132, %v64
    %135 = vset.pattern.permute.xlu0 3
    %136 = vperm.xlu0 %135, %v118
    %v137 = vpop.permute.xlu0 %136
    %v139 = vmul.f32 %v137, %v73
    %140 = vset.pattern.permute.xlu0 4
    %141 = vperm.xlu0 %140, %v118
    %v142 = vpop.permute.xlu0 %141
    %v144 = vmul.f32 %v142, %v82
    %145 = vset.pattern.permute.xlu0 5
    %146 = vperm.xlu0 %145, %v118
    %v147 = vpop.permute.xlu0 %146
    %v149 = vmul.f32 %v147, %v91
    %150 = vset.pattern.permute.xlu0 6
    %151 = vperm.xlu0 %150, %v118
    %v152 = vpop.permute.xlu0 %151
    %v154 = vmul.f32 %v152, %v100
    %155 = vset.pattern.permute.xlu0 7
    %156 = vperm.xlu0 %155, %v118
    %v157 = vpop.permute.xlu0 %156
    %v159 = vmul.f32 %v157, %v109
    %v160 = vadd.f32 %v124, %v129
    %v161 = vadd.f32 %v134, %v139
    %v162 = vadd.f32 %v144, %v149
    %v163 = vadd.f32 %v154, %v159
    %v164 = vadd.f32 %v160, %v161
    %v165 = vadd.f32 %v162, %v163
    %v166 = vadd.f32 %v164, %v165
    %168 = vset.pattern.permute.xlu0 0
    %169 = vperm.xlu0 %168, %v37
    %v170 = vpop.permute.xlu0 %169
    %v172 = vlaneseq
    %v173 = vshrl.u32 %v172, 7
    %v174 = vsub.s32 0, %v173
    %v175 = vrot.slane %v166, %v174
    %v176 = vmul.f32 %v170, %v175
    %177 = vset.pattern.permute.xlu0 1
    %178 = vperm.xlu0 %177, %v37
    %v179 = vpop.permute.xlu0 %178
    %v181 = vlaneseq
    %v182 = vshrl.u32 %v181, 7
    %v183 = vsub.s32 1, %v182
    %v184 = vrot.slane %v166, %v183
    %v185 = vmul.f32 %v179, %v184
    %186 = vset.pattern.permute.xlu0 2
    %187 = vperm.xlu0 %186, %v37
    %v188 = vpop.permute.xlu0 %187
    %v190 = vlaneseq
    %v191 = vshrl.u32 %v190, 7
    %v192 = vsub.s32 2, %v191
    %v193 = vrot.slane %v166, %v192
    %v194 = vmul.f32 %v188, %v193
    %195 = vset.pattern.permute.xlu0 3
    %196 = vperm.xlu0 %195, %v37
    %v197 = vpop.permute.xlu0 %196
    %v199 = vlaneseq
    %v200 = vshrl.u32 %v199, 7
    %v201 = vsub.s32 3, %v200
    %v202 = vrot.slane %v166, %v201
    %v203 = vmul.f32 %v197, %v202
    %204 = vset.pattern.permute.xlu0 4
    %205 = vperm.xlu0 %204, %v37
    %v206 = vpop.permute.xlu0 %205
    %v208 = vlaneseq
    %v209 = vshrl.u32 %v208, 7
    %v210 = vsub.s32 4, %v209
    %v211 = vrot.slane %v166, %v210
    %v212 = vmul.f32 %v206, %v211
    %213 = vset.pattern.permute.xlu0 5
    %214 = vperm.xlu0 %213, %v37
    %v215 = vpop.permute.xlu0 %214
    %v217 = vlaneseq
    %v218 = vshrl.u32 %v217, 7
    %v219 = vsub.s32 5, %v218
    %v220 = vrot.slane %v166, %v219
    %v221 = vmul.f32 %v215, %v220
    %222 = vset.pattern.permute.xlu0 6
    %223 = vperm.xlu0 %222, %v37
    %v224 = vpop.permute.xlu0 %223
    %v226 = vlaneseq
    %v227 = vshrl.u32 %v226, 7
    %v228 = vsub.s32 6, %v227
    %v229 = vrot.slane %v166, %v228
    %v230 = vmul.f32 %v224, %v229
    %231 = vset.pattern.permute.xlu0 7
    %232 = vperm.xlu0 %231, %v37
    %v233 = vpop.permute.xlu0 %232
    %v235 = vlaneseq
    %v236 = vshrl.u32 %v235, 7
    %v237 = vsub.s32 7, %v236
    %v238 = vrot.slane %v166, %v237
    %v239 = vmul.f32 %v233, %v238
    %v240 = vadd.f32 %v176, %v185
    %v241 = vadd.f32 %v194, %v203
    %v242 = vadd.f32 %v212, %v221
    %v243 = vadd.f32 %v230, %v239
    %v244 = vadd.f32 %v240, %v241
    %v245 = vadd.f32 %v242, %v243
    %v246 = vadd.f32 %v244, %v245
    %v247 = vadd.f32 %v118, %v246
    %v248 = vmul.f32 %v170, %v46
    %v249 = vmul.f32 %v179, %v55
    %v250 = vmul.f32 %v188, %v64
    %v251 = vmul.f32 %v197, %v73
    %v252 = vmul.f32 %v206, %v82
    %v253 = vmul.f32 %v215, %v91
    %v254 = vmul.f32 %v224, %v100
    %v255 = vmul.f32 %v233, %v109
    %v256 = vadd.f32 %v248, %v249
    %v257 = vadd.f32 %v250, %v251
    %v258 = vadd.f32 %v252, %v253
    %v259 = vadd.f32 %v254, %v255
    %v260 = vadd.f32 %v256, %v257
    %v261 = vadd.f32 %v258, %v259
    %v262 = vadd.f32 %v260, %v261
    %264 = vset.pattern.permute.xlu0 0
    %265 = vperm.xlu0 %264, %v247
    %v266 = vpop.permute.xlu0 %265
    %v268 = vlaneseq
    %v269 = vshrl.u32 %v268, 7
    %v270 = vsub.s32 0, %v269
    %v271 = vrot.slane %v262, %v270
    %v272 = vmul.f32 %v266, %v271
    %273 = vset.pattern.permute.xlu0 1
    %274 = vperm.xlu0 %273, %v247
    %v275 = vpop.permute.xlu0 %274
    %v277 = vlaneseq
    %v278 = vshrl.u32 %v277, 7
    %v279 = vsub.s32 1, %v278
    %v280 = vrot.slane %v262, %v279
    %v281 = vmul.f32 %v275, %v280
    %282 = vset.pattern.permute.xlu0 2
    %283 = vperm.xlu0 %282, %v247
    %v284 = vpop.permute.xlu0 %283
    %v286 = vlaneseq
    %v287 = vshrl.u32 %v286, 7
    %v288 = vsub.s32 2, %v287
    %v289 = vrot.slane %v262, %v288
    %v290 = vmul.f32 %v284, %v289
    %291 = vset.pattern.permute.xlu0 3
    %292 = vperm.xlu0 %291, %v247
    %v293 = vpop.permute.xlu0 %292
    %v295 = vlaneseq
    %v296 = vshrl.u32 %v295, 7
    %v297 = vsub.s32 3, %v296
    %v298 = vrot.slane %v262, %v297
    %v299 = vmul.f32 %v293, %v298
    %300 = vset.pattern.permute.xlu0 4
    %301 = vperm.xlu0 %300, %v247
    %v302 = vpop.permute.xlu0 %301
    %v304 = vlaneseq
    %v305 = vshrl.u32 %v304, 7
    %v306 = vsub.s32 4, %v305
    %v307 = vrot.slane %v262, %v306
    %v308 = vmul.f32 %v302, %v307
    %309 = vset.pattern.permute.xlu0 5
    %310 = vperm.xlu0 %309, %v247
    %v311 = vpop.permute.xlu0 %310
    %v313 = vlaneseq
    %v314 = vshrl.u32 %v313, 7
    %v315 = vsub.s32 5, %v314
    %v316 = vrot.slane %v262, %v315
    %v317 = vmul.f32 %v311, %v316
    %318 = vset.pattern.permute.xlu0 6
    %319 = vperm.xlu0 %318, %v247
    %v320 = vpop.permute.xlu0 %319
    %v322 = vlaneseq
    %v323 = vshrl.u32 %v322, 7
    %v324 = vsub.s32 6, %v323
    %v325 = vrot.slane %v262, %v324
    %v326 = vmul.f32 %v320, %v325
    %327 = vset.pattern.permute.xlu0 7
    %328 = vperm.xlu0 %327, %v247
    %v329 = vpop.permute.xlu0 %328
    %v331 = vlaneseq
    %v332 = vshrl.u32 %v331, 7
    %v333 = vsub.s32 7, %v332
    %v334 = vrot.slane %v262, %v333
    %v335 = vmul.f32 %v329, %v334
    %v336 = vadd.f32 %v272, %v281
    %v337 = vadd.f32 %v290, %v299
    %v338 = vadd.f32 %v308, %v317
    %v339 = vadd.f32 %v326, %v335
    %v340 = vadd.f32 %v336, %v337
    %v341 = vadd.f32 %v338, %v339
    %v342 = vadd.f32 %v340, %v341
    %344 = vset.pattern.permute.xlu0 0
    %345 = vperm.xlu0 %344, %v262
    %v346 = vpop.permute.xlu0 %345
    %v348 = vlaneseq
    %v349 = vshrl.u32 %v348, 7
    %v350 = vsub.s32 0, %v349
    %v351 = vrot.slane %v342, %v350
    %v352 = vmul.f32 %v346, %v351
    %353 = vset.pattern.permute.xlu0 1
    %354 = vperm.xlu0 %353, %v262
    %v355 = vpop.permute.xlu0 %354
    %v357 = vlaneseq
    %v358 = vshrl.u32 %v357, 7
    %v359 = vsub.s32 1, %v358
    %v360 = vrot.slane %v342, %v359
    %v361 = vmul.f32 %v355, %v360
    %362 = vset.pattern.permute.xlu0 2
    %363 = vperm.xlu0 %362, %v262
    %v364 = vpop.permute.xlu0 %363
    %v366 = vlaneseq
    %v367 = vshrl.u32 %v366, 7
    %v368 = vsub.s32 2, %v367
    %v369 = vrot.slane %v342, %v368
    %v370 = vmul.f32 %v364, %v369
    %371 = vset.pattern.permute.xlu0 3
    %372 = vperm.xlu0 %371, %v262
    %v373 = vpop.permute.xlu0 %372
    %v375 = vlaneseq
    %v376 = vshrl.u32 %v375, 7
    %v377 = vsub.s32 3, %v376
    %v378 = vrot.slane %v342, %v377
    %v379 = vmul.f32 %v373, %v378
    %380 = vset.pattern.permute.xlu0 4
    %381 = vperm.xlu0 %380, %v262
    %v382 = vpop.permute.xlu0 %381
    %v384 = vlaneseq
    %v385 = vshrl.u32 %v384, 7
    %v386 = vsub.s32 4, %v385
    %v387 = vrot.slane %v342, %v386
    %v388 = vmul.f32 %v382, %v387
    %389 = vset.pattern.permute.xlu0 5
    %390 = vperm.xlu0 %389, %v262
    %v391 = vpop.permute.xlu0 %390
    %v393 = vlaneseq
    %v394 = vshrl.u32 %v393, 7
    %v395 = vsub.s32 5, %v394
    %v396 = vrot.slane %v342, %v395
    %v397 = vmul.f32 %v391, %v396
    %398 = vset.pattern.permute.xlu0 6
    %399 = vperm.xlu0 %398, %v262
    %v400 = vpop.permute.xlu0 %399
    %v402 = vlaneseq
    %v403 = vshrl.u32 %v402, 7
    %v404 = vsub.s32 6, %v403
    %v405 = vrot.slane %v342, %v404
    %v406 = vmul.f32 %v400, %v405
    %407 = vset.pattern.permute.xlu0 7
    %408 = vperm.xlu0 %407, %v262
    %v409 = vpop.permute.xlu0 %408
    %v411 = vlaneseq
    %v412 = vshrl.u32 %v411, 7
    %v413 = vsub.s32 7, %v412
    %v414 = vrot.slane %v342, %v413
    %v415 = vmul.f32 %v409, %v414
    %v416 = vadd.f32 %v352, %v361
    %v417 = vadd.f32 %v370, %v379
    %v418 = vadd.f32 %v388, %v397
    %v419 = vadd.f32 %v406, %v415
    %v420 = vadd.f32 %v416, %v417
    %v421 = vadd.f32 %v418, %v419
    %v422 = vadd.f32 %v420, %v421
    %v423 = vadd.f32 %v247, %v422
    %v424 = vmul.f32 %v346, %v271
    %v425 = vmul.f32 %v355, %v280
    %v426 = vmul.f32 %v364, %v289
    %v427 = vmul.f32 %v373, %v298
    %v428 = vmul.f32 %v382, %v307
    %v429 = vmul.f32 %v391, %v316
    %v430 = vmul.f32 %v400, %v325
    %v431 = vmul.f32 %v409, %v334
    %v432 = vadd.f32 %v424, %v425
    %v433 = vadd.f32 %v426, %v427
    %v434 = vadd.f32 %v428, %v429
    %v435 = vadd.f32 %v430, %v431
    %v436 = vadd.f32 %v432, %v433
    %v437 = vadd.f32 %v434, %v435
    %v438 = vadd.f32 %v436, %v437
    %440 = vset.pattern.permute.xlu0 0
    %441 = vperm.xlu0 %440, %v423
    %v442 = vpop.permute.xlu0 %441
    %v444 = vlaneseq
    %v445 = vshrl.u32 %v444, 7
    %v446 = vsub.s32 0, %v445
    %v447 = vrot.slane %v438, %v446
    %v448 = vmul.f32 %v442, %v447
    %449 = vset.pattern.permute.xlu0 1
    %450 = vperm.xlu0 %449, %v423
    %v451 = vpop.permute.xlu0 %450
    %v453 = vlaneseq
    %v454 = vshrl.u32 %v453, 7
    %v455 = vsub.s32 1, %v454
    %v456 = vrot.slane %v438, %v455
    %v457 = vmul.f32 %v451, %v456
    %458 = vset.pattern.permute.xlu0 2
    %459 = vperm.xlu0 %458, %v423
    %v460 = vpop.permute.xlu0 %459
    %v462 = vlaneseq
    %v463 = vshrl.u32 %v462, 7
    %v464 = vsub.s32 2, %v463
    %v465 = vrot.slane %v438, %v464
    %v466 = vmul.f32 %v460, %v465
    %467 = vset.pattern.permute.xlu0 3
    %468 = vperm.xlu0 %467, %v423
    %v469 = vpop.permute.xlu0 %468
    %v471 = vlaneseq
    %v472 = vshrl.u32 %v471, 7
    %v473 = vsub.s32 3, %v472
    %v474 = vrot.slane %v438, %v473
    %v475 = vmul.f32 %v469, %v474
    %476 = vset.pattern.permute.xlu0 4
    %477 = vperm.xlu0 %476, %v423
    %v478 = vpop.permute.xlu0 %477
    %v480 = vlaneseq
    %v481 = vshrl.u32 %v480, 7
    %v482 = vsub.s32 4, %v481
    %v483 = vrot.slane %v438, %v482
    %v484 = vmul.f32 %v478, %v483
    %485 = vset.pattern.permute.xlu0 5
    %486 = vperm.xlu0 %485, %v423
    %v487 = vpop.permute.xlu0 %486
    %v489 = vlaneseq
    %v490 = vshrl.u32 %v489, 7
    %v491 = vsub.s32 5, %v490
    %v492 = vrot.slane %v438, %v491
    %v493 = vmul.f32 %v487, %v492
    %494 = vset.pattern.permute.xlu0 6
    %495 = vperm.xlu0 %494, %v423
    %v496 = vpop.permute.xlu0 %495
    %v498 = vlaneseq
    %v499 = vshrl.u32 %v498, 7
    %v500 = vsub.s32 6, %v499
    %v501 = vrot.slane %v438, %v500
    %v502 = vmul.f32 %v496, %v501
    %503 = vset.pattern.permute.xlu0 7
    %504 = vperm.xlu0 %503, %v423
    %v505 = vpop.permute.xlu0 %504
    %v507 = vlaneseq
    %v508 = vshrl.u32 %v507, 7
    %v509 = vsub.s32 7, %v508
    %v510 = vrot.slane %v438, %v509
    %v511 = vmul.f32 %v505, %v510
    %v512 = vadd.f32 %v448, %v457
    %v513 = vadd.f32 %v466, %v475
    %v514 = vadd.f32 %v484, %v493
    %v515 = vadd.f32 %v502, %v511
    %v516 = vadd.f32 %v512, %v513
    %v517 = vadd.f32 %v514, %v515
    %v518 = vadd.f32 %v516, %v517
    %520 = vset.pattern.permute.xlu0 0
    %521 = vperm.xlu0 %520, %v438
    %v522 = vpop.permute.xlu0 %521
    %v524 = vlaneseq
    %v525 = vshrl.u32 %v524, 7
    %v526 = vsub.s32 0, %v525
    %v527 = vrot.slane %v518, %v526
    %v528 = vmul.f32 %v522, %v527
    %529 = vset.pattern.permute.xlu0 1
    %530 = vperm.xlu0 %529, %v438
    %v531 = vpop.permute.xlu0 %530
    %v533 = vlaneseq
    %v534 = vshrl.u32 %v533, 7
    %v535 = vsub.s32 1, %v534
    %v536 = vrot.slane %v518, %v535
    %v537 = vmul.f32 %v531, %v536
    %538 = vset.pattern.permute.xlu0 2
    %539 = vperm.xlu0 %538, %v438
    %v540 = vpop.permute.xlu0 %539
    %v542 = vlaneseq
    %v543 = vshrl.u32 %v542, 7
    %v544 = vsub.s32 2, %v543
    %v545 = vrot.slane %v518, %v544
    %v546 = vmul.f32 %v540, %v545
    %547 = vset.pattern.permute.xlu0 3
    %548 = vperm.xlu0 %547, %v438
    %v549 = vpop.permute.xlu0 %548
    %v551 = vlaneseq
    %v552 = vshrl.u32 %v551, 7
    %v553 = vsub.s32 3, %v552
    %v554 = vrot.slane %v518, %v553
    %v555 = vmul.f32 %v549, %v554
    %556 = vset.pattern.permute.xlu0 4
    %557 = vperm.xlu0 %556, %v438
    %v558 = vpop.permute.xlu0 %557
    %v560 = vlaneseq
    %v561 = vshrl.u32 %v560, 7
    %v562 = vsub.s32 4, %v561
    %v563 = vrot.slane %v518, %v562
    %v564 = vmul.f32 %v558, %v563
    %565 = vset.pattern.permute.xlu0 5
    %566 = vperm.xlu0 %565, %v438
    %v567 = vpop.permute.xlu0 %566
    %v569 = vlaneseq
    %v570 = vshrl.u32 %v569, 7
    %v571 = vsub.s32 5, %v570
    %v572 = vrot.slane %v518, %v571
    %v573 = vmul.f32 %v567, %v572
    %574 = vset.pattern.permute.xlu0 6
    %575 = vperm.xlu0 %574, %v438
    %v576 = vpop.permute.xlu0 %575
    %v578 = vlaneseq
    %v579 = vshrl.u32 %v578, 7
    %v580 = vsub.s32 6, %v579
    %v581 = vrot.slane %v518, %v580
    %v582 = vmul.f32 %v576, %v581
    %583 = vset.pattern.permute.xlu0 7
    %584 = vperm.xlu0 %583, %v438
    %v585 = vpop.permute.xlu0 %584
    %v587 = vlaneseq
    %v588 = vshrl.u32 %v587, 7
    %v589 = vsub.s32 7, %v588
    %v590 = vrot.slane %v518, %v589
    %v591 = vmul.f32 %v585, %v590
    %v592 = vadd.f32 %v528, %v537
    %v593 = vadd.f32 %v546, %v555
    %v594 = vadd.f32 %v564, %v573
    %v595 = vadd.f32 %v582, %v591
    %v596 = vadd.f32 %v592, %v593
    %v597 = vadd.f32 %v594, %v595
    %v598 = vadd.f32 %v596, %v597
    %v599 = vadd.f32 %v423, %v598
    %v600 = vmul.f32 %v522, %v447
    %v601 = vmul.f32 %v531, %v456
    %v602 = vmul.f32 %v540, %v465
    %v603 = vmul.f32 %v549, %v474
    %v604 = vmul.f32 %v558, %v483
    %v605 = vmul.f32 %v567, %v492
    %v606 = vmul.f32 %v576, %v501
    %v607 = vmul.f32 %v585, %v510
    %v608 = vadd.f32 %v600, %v601
    %v609 = vadd.f32 %v602, %v603
    %v610 = vadd.f32 %v604, %v605
    %v611 = vadd.f32 %v606, %v607
    %v612 = vadd.f32 %v608, %v609
    %v613 = vadd.f32 %v610, %v611
    %v614 = vadd.f32 %v612, %v613
    %616 = vset.pattern.permute.xlu0 0
    %617 = vperm.xlu0 %616, %v599
    %v618 = vpop.permute.xlu0 %617
    %v620 = vlaneseq
    %v621 = vshrl.u32 %v620, 7
    %v622 = vsub.s32 0, %v621
    %v623 = vrot.slane %v614, %v622
    %v624 = vmul.f32 %v618, %v623
    %625 = vset.pattern.permute.xlu0 1
    %626 = vperm.xlu0 %625, %v599
    %v627 = vpop.permute.xlu0 %626
    %v629 = vlaneseq
    %v630 = vshrl.u32 %v629, 7
    %v631 = vsub.s32 1, %v630
    %v632 = vrot.slane %v614, %v631
    %v633 = vmul.f32 %v627, %v632
    %634 = vset.pattern.permute.xlu0 2
    %635 = vperm.xlu0 %634, %v599
    %v636 = vpop.permute.xlu0 %635
    %v638 = vlaneseq
    %v639 = vshrl.u32 %v638, 7
    %v640 = vsub.s32 2, %v639
    %v641 = vrot.slane %v614, %v640
    %v642 = vmul.f32 %v636, %v641
    %643 = vset.pattern.permute.xlu0 3
    %644 = vperm.xlu0 %643, %v599
    %v645 = vpop.permute.xlu0 %644
    %v647 = vlaneseq
    %v648 = vshrl.u32 %v647, 7
    %v649 = vsub.s32 3, %v648
    %v650 = vrot.slane %v614, %v649
    %v651 = vmul.f32 %v645, %v650
    %652 = vset.pattern.permute.xlu0 4
    %653 = vperm.xlu0 %652, %v599
    %v654 = vpop.permute.xlu0 %653
    %v656 = vlaneseq
    %v657 = vshrl.u32 %v656, 7
    %v658 = vsub.s32 4, %v657
    %v659 = vrot.slane %v614, %v658
    %v660 = vmul.f32 %v654, %v659
    %661 = vset.pattern.permute.xlu0 5
    %662 = vperm.xlu0 %661, %v599
    %v663 = vpop.permute.xlu0 %662
    %v665 = vlaneseq
    %v666 = vshrl.u32 %v665, 7
    %v667 = vsub.s32 5, %v666
    %v668 = vrot.slane %v614, %v667
    %v669 = vmul.f32 %v663, %v668
    %670 = vset.pattern.permute.xlu0 6
    %671 = vperm.xlu0 %670, %v599
    %v672 = vpop.permute.xlu0 %671
    %v674 = vlaneseq
    %v675 = vshrl.u32 %v674, 7
    %v676 = vsub.s32 6, %v675
    %v677 = vrot.slane %v614, %v676
    %v678 = vmul.f32 %v672, %v677
    %679 = vset.pattern.permute.xlu0 7
    %680 = vperm.xlu0 %679, %v599
    %v681 = vpop.permute.xlu0 %680
    %v683 = vlaneseq
    %v684 = vshrl.u32 %v683, 7
    %v685 = vsub.s32 7, %v684
    %v686 = vrot.slane %v614, %v685
    %v687 = vmul.f32 %v681, %v686
    %v688 = vadd.f32 %v624, %v633
    %v689 = vadd.f32 %v642, %v651
    %v690 = vadd.f32 %v660, %v669
    %v691 = vadd.f32 %v678, %v687
    %v692 = vadd.f32 %v688, %v689
    %v693 = vadd.f32 %v690, %v691
    %v694 = vadd.f32 %v692, %v693
    %696 = vset.pattern.permute.xlu0 0
    %697 = vperm.xlu0 %696, %v614
    %v698 = vpop.permute.xlu0 %697
    %v700 = vlaneseq
    %v701 = vshrl.u32 %v700, 7
    %v702 = vsub.s32 0, %v701
    %v703 = vrot.slane %v694, %v702
    %v704 = vmul.f32 %v698, %v703
    %705 = vset.pattern.permute.xlu0 1
    %706 = vperm.xlu0 %705, %v614
    %v707 = vpop.permute.xlu0 %706
    %v709 = vlaneseq
    %v710 = vshrl.u32 %v709, 7
    %v711 = vsub.s32 1, %v710
    %v712 = vrot.slane %v694, %v711
    %v713 = vmul.f32 %v707, %v712
    %714 = vset.pattern.permute.xlu0 2
    %715 = vperm.xlu0 %714, %v614
    %v716 = vpop.permute.xlu0 %715
    %v718 = vlaneseq
    %v719 = vshrl.u32 %v718, 7
    %v720 = vsub.s32 2, %v719
    %v721 = vrot.slane %v694, %v720
    %v722 = vmul.f32 %v716, %v721
    %723 = vset.pattern.permute.xlu0 3
    %724 = vperm.xlu0 %723, %v614
    %v725 = vpop.permute.xlu0 %724
    %v727 = vlaneseq
    %v728 = vshrl.u32 %v727, 7
    %v729 = vsub.s32 3, %v728
    %v730 = vrot.slane %v694, %v729
    %v731 = vmul.f32 %v725, %v730
    %732 = vset.pattern.permute.xlu0 4
    %733 = vperm.xlu0 %732, %v614
    %v734 = vpop.permute.xlu0 %733
    %v736 = vlaneseq
    %v737 = vshrl.u32 %v736, 7
    %v738 = vsub.s32 4, %v737
    %v739 = vrot.slane %v694, %v738
    %v740 = vmul.f32 %v734, %v739
    %741 = vset.pattern.permute.xlu0 5
    %742 = vperm.xlu0 %741, %v614
    %v743 = vpop.permute.xlu0 %742
    %v745 = vlaneseq
    %v746 = vshrl.u32 %v745, 7
    %v747 = vsub.s32 5, %v746
    %v748 = vrot.slane %v694, %v747
    %v749 = vmul.f32 %v743, %v748
    %750 = vset.pattern.permute.xlu0 6
    %751 = vperm.xlu0 %750, %v614
    %v752 = vpop.permute.xlu0 %751
    %v754 = vlaneseq
    %v755 = vshrl.u32 %v754, 7
    %v756 = vsub.s32 6, %v755
    %v757 = vrot.slane %v694, %v756
    %v758 = vmul.f32 %v752, %v757
    %759 = vset.pattern.permute.xlu0 7
    %760 = vperm.xlu0 %759, %v614
    %v761 = vpop.permute.xlu0 %760
    %v763 = vlaneseq
    %v764 = vshrl.u32 %v763, 7
    %v765 = vsub.s32 7, %v764
    %v766 = vrot.slane %v694, %v765
    %v767 = vmul.f32 %v761, %v766
    %v768 = vadd.f32 %v704, %v713
    %v769 = vadd.f32 %v722, %v731
    %v770 = vadd.f32 %v740, %v749
    %v771 = vadd.f32 %v758, %v767
    %v772 = vadd.f32 %v768, %v769
    %v773 = vadd.f32 %v770, %v771
    %v774 = vadd.f32 %v772, %v773
    %v775 = vadd.f32 %v599, %v774
    %v776 = vmul.f32 %v698, %v623
    %v777 = vmul.f32 %v707, %v632
    %v778 = vmul.f32 %v716, %v641
    %v779 = vmul.f32 %v725, %v650
    %v780 = vmul.f32 %v734, %v659
    %v781 = vmul.f32 %v743, %v668
    %v782 = vmul.f32 %v752, %v677
    %v783 = vmul.f32 %v761, %v686
    %v784 = vadd.f32 %v776, %v777
    %v785 = vadd.f32 %v778, %v779
    %v786 = vadd.f32 %v780, %v781
    %v787 = vadd.f32 %v782, %v783
    %v788 = vadd.f32 %v784, %v785
    %v789 = vadd.f32 %v786, %v787
    %v790 = vadd.f32 %v788, %v789
    %792 = vset.pattern.permute.xlu0 0
    %793 = vperm.xlu0 %792, %v775
    %v794 = vpop.permute.xlu0 %793
    %v796 = vlaneseq
    %v797 = vshrl.u32 %v796, 7
    %v798 = vsub.s32 0, %v797
    %v799 = vrot.slane %v790, %v798
    %v800 = vmul.f32 %v794, %v799
    %801 = vset.pattern.permute.xlu0 1
    %802 = vperm.xlu0 %801, %v775
    %v803 = vpop.permute.xlu0 %802
    %v805 = vlaneseq
    %v806 = vshrl.u32 %v805, 7
    %v807 = vsub.s32 1, %v806
    %v808 = vrot.slane %v790, %v807
    %v809 = vmul.f32 %v803, %v808
    %810 = vset.pattern.permute.xlu0 2
    %811 = vperm.xlu0 %810, %v775
    %v812 = vpop.permute.xlu0 %811
    %v814 = vlaneseq
    %v815 = vshrl.u32 %v814, 7
    %v816 = vsub.s32 2, %v815
    %v817 = vrot.slane %v790, %v816
    %v818 = vmul.f32 %v812, %v817
    %819 = vset.pattern.permute.xlu0 3
    %820 = vperm.xlu0 %819, %v775
    %v821 = vpop.permute.xlu0 %820
    %v823 = vlaneseq
    %v824 = vshrl.u32 %v823, 7
    %v825 = vsub.s32 3, %v824
    %v826 = vrot.slane %v790, %v825
    %v827 = vmul.f32 %v821, %v826
    %828 = vset.pattern.permute.xlu0 4
    %829 = vperm.xlu0 %828, %v775
    %v830 = vpop.permute.xlu0 %829
    %v832 = vlaneseq
    %v833 = vshrl.u32 %v832, 7
    %v834 = vsub.s32 4, %v833
    %v835 = vrot.slane %v790, %v834
    %v836 = vmul.f32 %v830, %v835
    %837 = vset.pattern.permute.xlu0 5
    %838 = vperm.xlu0 %837, %v775
    %v839 = vpop.permute.xlu0 %838
    %v841 = vlaneseq
    %v842 = vshrl.u32 %v841, 7
    %v843 = vsub.s32 5, %v842
    %v844 = vrot.slane %v790, %v843
    %v845 = vmul.f32 %v839, %v844
    %846 = vset.pattern.permute.xlu0 6
    %847 = vperm.xlu0 %846, %v775
    %v848 = vpop.permute.xlu0 %847
    %v850 = vlaneseq
    %v851 = vshrl.u32 %v850, 7
    %v852 = vsub.s32 6, %v851
    %v853 = vrot.slane %v790, %v852
    %v854 = vmul.f32 %v848, %v853
    %855 = vset.pattern.permute.xlu0 7
    %856 = vperm.xlu0 %855, %v775
    %v857 = vpop.permute.xlu0 %856
    %v859 = vlaneseq
    %v860 = vshrl.u32 %v859, 7
    %v861 = vsub.s32 7, %v860
    %v862 = vrot.slane %v790, %v861
    %v863 = vmul.f32 %v857, %v862
    %v864 = vadd.f32 %v800, %v809
    %v865 = vadd.f32 %v818, %v827
    %v866 = vadd.f32 %v836, %v845
    %v867 = vadd.f32 %v854, %v863
    %v868 = vadd.f32 %v864, %v865
    %v869 = vadd.f32 %v866, %v867
    %v870 = vadd.f32 %v868, %v869
    %872 = vset.pattern.permute.xlu0 0
    %873 = vperm.xlu0 %872, %v790
    %v874 = vpop.permute.xlu0 %873
    %v876 = vlaneseq
    %v877 = vshrl.u32 %v876, 7
    %v878 = vsub.s32 0, %v877
    %v879 = vrot.slane %v870, %v878
    %v880 = vmul.f32 %v874, %v879
    %881 = vset.pattern.permute.xlu0 1
    %882 = vperm.xlu0 %881, %v790
    %v883 = vpop.permute.xlu0 %882
    %v885 = vlaneseq
    %v886 = vshrl.u32 %v885, 7
    %v887 = vsub.s32 1, %v886
    %v888 = vrot.slane %v870, %v887
    %v889 = vmul.f32 %v883, %v888
    %890 = vset.pattern.permute.xlu0 2
    %891 = vperm.xlu0 %890, %v790
    %v892 = vpop.permute.xlu0 %891
    %v894 = vlaneseq
    %v895 = vshrl.u32 %v894, 7
    %v896 = vsub.s32 2, %v895
    %v897 = vrot.slane %v870, %v896
    %v898 = vmul.f32 %v892, %v897
    %899 = vset.pattern.permute.xlu0 3
    %900 = vperm.xlu0 %899, %v790
    %v901 = vpop.permute.xlu0 %900
    %v903 = vlaneseq
    %v904 = vshrl.u32 %v903, 7
    %v905 = vsub.s32 3, %v904
    %v906 = vrot.slane %v870, %v905
    %v907 = vmul.f32 %v901, %v906
    %908 = vset.pattern.permute.xlu0 4
    %909 = vperm.xlu0 %908, %v790
    %v910 = vpop.permute.xlu0 %909
    %v912 = vlaneseq
    %v913 = vshrl.u32 %v912, 7
    %v914 = vsub.s32 4, %v913
    %v915 = vrot.slane %v870, %v914
    %v916 = vmul.f32 %v910, %v915
    %917 = vset.pattern.permute.xlu0 5
    %918 = vperm.xlu0 %917, %v790
    %v919 = vpop.permute.xlu0 %918
    %v921 = vlaneseq
    %v922 = vshrl.u32 %v921, 7
    %v923 = vsub.s32 5, %v922
    %v924 = vrot.slane %v870, %v923
    %v925 = vmul.f32 %v919, %v924
    %926 = vset.pattern.permute.xlu0 6
    %927 = vperm.xlu0 %926, %v790
    %v928 = vpop.permute.xlu0 %927
    %v930 = vlaneseq
    %v931 = vshrl.u32 %v930, 7
    %v932 = vsub.s32 6, %v931
    %v933 = vrot.slane %v870, %v932
    %v934 = vmul.f32 %v928, %v933
    %935 = vset.pattern.permute.xlu0 7
    %936 = vperm.xlu0 %935, %v790
    %v937 = vpop.permute.xlu0 %936
    %v939 = vlaneseq
    %v940 = vshrl.u32 %v939, 7
    %v941 = vsub.s32 7, %v940
    %v942 = vrot.slane %v870, %v941
    %v943 = vmul.f32 %v937, %v942
    %v944 = vadd.f32 %v880, %v889
    %v945 = vadd.f32 %v898, %v907
    %v946 = vadd.f32 %v916, %v925
    %v947 = vadd.f32 %v934, %v943
    %v948 = vadd.f32 %v944, %v945
    %v949 = vadd.f32 %v946, %v947
    %v950 = vadd.f32 %v948, %v949
    %v951 = vadd.f32 %v775, %v950
    %v952 = vmul.f32 %v874, %v799
    %v953 = vmul.f32 %v883, %v808
    %v954 = vmul.f32 %v892, %v817
    %v955 = vmul.f32 %v901, %v826
    %v956 = vmul.f32 %v910, %v835
    %v957 = vmul.f32 %v919, %v844
    %v958 = vmul.f32 %v928, %v853
    %v959 = vmul.f32 %v937, %v862
    %v960 = vadd.f32 %v952, %v953
    %v961 = vadd.f32 %v954, %v955
    %v962 = vadd.f32 %v956, %v957
    %v963 = vadd.f32 %v958, %v959
    %v964 = vadd.f32 %v960, %v961
    %v965 = vadd.f32 %v962, %v963
    %v966 = vadd.f32 %v964, %v965
    %v967 = vmul.f32 %v266, %v799
    %v968 = vmul.f32 %v275, %v808
    %v969 = vmul.f32 %v284, %v817
    %v970 = vmul.f32 %v293, %v826
    %v971 = vmul.f32 %v302, %v835
    %v972 = vmul.f32 %v311, %v844
    %v973 = vmul.f32 %v320, %v853
    %v974 = vmul.f32 %v329, %v862
    %v975 = vadd.f32 %v967, %v968
    %v976 = vadd.f32 %v969, %v970
    %v977 = vadd.f32 %v971, %v972
    %v978 = vadd.f32 %v973, %v974
    %v979 = vadd.f32 %v975, %v976
    %v980 = vadd.f32 %v977, %v978
    %v981 = vadd.f32 %v979, %v980
    %v982 = vlaneseq
    %v983 = vshrl.u32 %v982, 7
    %v984 = vsub.s32 0, %v983
    %v985 = vrot.slane %v981, %v984
    %v986 = vmul.f32 %v874, %v985
    %v987 = vlaneseq
    %v988 = vshrl.u32 %v987, 7
    %v989 = vsub.s32 1, %v988
    %v990 = vrot.slane %v981, %v989
    %v991 = vmul.f32 %v883, %v990
    %v992 = vlaneseq
    %v993 = vshrl.u32 %v992, 7
    %v994 = vsub.s32 2, %v993
    %v995 = vrot.slane %v981, %v994
    %v996 = vmul.f32 %v892, %v995
    %v997 = vlaneseq
    %v998 = vshrl.u32 %v997, 7
    %v999 = vsub.s32 3, %v998
    %v1000 = vrot.slane %v981, %v999
    %v1001 = vmul.f32 %v901, %v1000
    %v1002 = vlaneseq
    %v1003 = vshrl.u32 %v1002, 7
    %v1004 = vsub.s32 4, %v1003
    %v1005 = vrot.slane %v981, %v1004
    %v1006 = vmul.f32 %v910, %v1005
    %v1007 = vlaneseq
    %v1008 = vshrl.u32 %v1007, 7
    %v1009 = vsub.s32 5, %v1008
    %v1010 = vrot.slane %v981, %v1009
    %v1011 = vmul.f32 %v919, %v1010
    %v1012 = vlaneseq
    %v1013 = vshrl.u32 %v1012, 7
    %v1014 = vsub.s32 6, %v1013
    %v1015 = vrot.slane %v981, %v1014
    %v1016 = vmul.f32 %v928, %v1015
    %v1017 = vlaneseq
    %v1018 = vshrl.u32 %v1017, 7
    %v1019 = vsub.s32 7, %v1018
    %v1020 = vrot.slane %v981, %v1019
    %v1021 = vmul.f32 %v937, %v1020
    %v1022 = vadd.f32 %v986, %v991
    %v1023 = vadd.f32 %v996, %v1001
    %v1024 = vadd.f32 %v1006, %v1011
    %v1025 = vadd.f32 %v1016, %v1021
    %v1026 = vadd.f32 %v1022, %v1023
    %v1027 = vadd.f32 %v1024, %v1025
    %v1028 = vadd.f32 %v1026, %v1027
    %v1029 = vadd.f32 %v775, %v1028
    %v1030 = vmul.f32 %v874, %v271
    %v1031 = vmul.f32 %v883, %v280
    %v1032 = vmul.f32 %v892, %v289
    %v1033 = vmul.f32 %v901, %v298
    %v1034 = vmul.f32 %v910, %v307
    %v1035 = vmul.f32 %v919, %v316
    %v1036 = vmul.f32 %v928, %v325
    %v1037 = vmul.f32 %v937, %v334
    %v1038 = vadd.f32 %v1030, %v1031
    %v1039 = vadd.f32 %v1032, %v1033
    %v1040 = vadd.f32 %v1034, %v1035
    %v1041 = vadd.f32 %v1036, %v1037
    %v1042 = vadd.f32 %v1038, %v1039
    %v1043 = vadd.f32 %v1040, %v1041
    %v1044 = vadd.f32 %v1042, %v1043
    %1046 = vset.pattern.permute.xlu0 0
    %1047 = vperm.xlu0 %1046, %v1029
    %v1048 = vpop.permute.xlu0 %1047
    %v1050 = vlaneseq
    %v1051 = vshrl.u32 %v1050, 7
    %v1052 = vsub.s32 0, %v1051
    %v1053 = vrot.slane %v966, %v1052
    %v1054 = vmul.f32 %v1048, %v1053
    %1055 = vset.pattern.permute.xlu0 1
    %1056 = vperm.xlu0 %1055, %v1029
    %v1057 = vpop.permute.xlu0 %1056
    %v1059 = vlaneseq
    %v1060 = vshrl.u32 %v1059, 7
    %v1061 = vsub.s32 1, %v1060
    %v1062 = vrot.slane %v966, %v1061
    %v1063 = vmul.f32 %v1057, %v1062
    %1064 = vset.pattern.permute.xlu0 2
    %1065 = vperm.xlu0 %1064, %v1029
    %v1066 = vpop.permute.xlu0 %1065
    %v1068 = vlaneseq
    %v1069 = vshrl.u32 %v1068, 7
    %v1070 = vsub.s32 2, %v1069
    %v1071 = vrot.slane %v966, %v1070
    %v1072 = vmul.f32 %v1066, %v1071
    %1073 = vset.pattern.permute.xlu0 3
    %1074 = vperm.xlu0 %1073, %v1029
    %v1075 = vpop.permute.xlu0 %1074
    %v1077 = vlaneseq
    %v1078 = vshrl.u32 %v1077, 7
    %v1079 = vsub.s32 3, %v1078
    %v1080 = vrot.slane %v966, %v1079
    %v1081 = vmul.f32 %v1075, %v1080
    %1082 = vset.pattern.permute.xlu0 4
    %1083 = vperm.xlu0 %1082, %v1029
    %v1084 = vpop.permute.xlu0 %1083
    %v1086 = vlaneseq
    %v1087 = vshrl.u32 %v1086, 7
    %v1088 = vsub.s32 4, %v1087
    %v1089 = vrot.slane %v966, %v1088
    %v1090 = vmul.f32 %v1084, %v1089
    %1091 = vset.pattern.permute.xlu0 5
    %1092 = vperm.xlu0 %1091, %v1029
    %v1093 = vpop.permute.xlu0 %1092
    %v1095 = vlaneseq
    %v1096 = vshrl.u32 %v1095, 7
    %v1097 = vsub.s32 5, %v1096
    %v1098 = vrot.slane %v966, %v1097
    %v1099 = vmul.f32 %v1093, %v1098
    %1100 = vset.pattern.permute.xlu0 6
    %1101 = vperm.xlu0 %1100, %v1029
    %v1102 = vpop.permute.xlu0 %1101
    %v1104 = vlaneseq
    %v1105 = vshrl.u32 %v1104, 7
    %v1106 = vsub.s32 6, %v1105
    %v1107 = vrot.slane %v966, %v1106
    %v1108 = vmul.f32 %v1102, %v1107
    %1109 = vset.pattern.permute.xlu0 7
    %1110 = vperm.xlu0 %1109, %v1029
    %v1111 = vpop.permute.xlu0 %1110
    %v1113 = vlaneseq
    %v1114 = vshrl.u32 %v1113, 7
    %v1115 = vsub.s32 7, %v1114
    %v1116 = vrot.slane %v966, %v1115
    %v1117 = vmul.f32 %v1111, %v1116
    %v1118 = vadd.f32 %v1054, %v1063
    %v1119 = vadd.f32 %v1072, %v1081
    %v1120 = vadd.f32 %v1090, %v1099
    %v1121 = vadd.f32 %v1108, %v1117
    %v1122 = vadd.f32 %v1118, %v1119
    %v1123 = vadd.f32 %v1120, %v1121
    %v1124 = vadd.f32 %v1122, %v1123
    %1126 = vset.pattern.permute.xlu0 0
    %1127 = vperm.xlu0 %1126, %v966
    %v1128 = vpop.permute.xlu0 %1127
    %v1130 = vlaneseq
    %v1131 = vshrl.u32 %v1130, 7
    %v1132 = vsub.s32 0, %v1131
    %v1133 = vrot.slane %v1124, %v1132
    %v1134 = vmul.f32 %v1128, %v1133
    %1135 = vset.pattern.permute.xlu0 1
    %1136 = vperm.xlu0 %1135, %v966
    %v1137 = vpop.permute.xlu0 %1136
    %v1139 = vlaneseq
    %v1140 = vshrl.u32 %v1139, 7
    %v1141 = vsub.s32 1, %v1140
    %v1142 = vrot.slane %v1124, %v1141
    %v1143 = vmul.f32 %v1137, %v1142
    %1144 = vset.pattern.permute.xlu0 2
    %1145 = vperm.xlu0 %1144, %v966
    %v1146 = vpop.permute.xlu0 %1145
    %v1148 = vlaneseq
    %v1149 = vshrl.u32 %v1148, 7
    %v1150 = vsub.s32 2, %v1149
    %v1151 = vrot.slane %v1124, %v1150
    %v1152 = vmul.f32 %v1146, %v1151
    %1153 = vset.pattern.permute.xlu0 3
    %1154 = vperm.xlu0 %1153, %v966
    %v1155 = vpop.permute.xlu0 %1154
    %v1157 = vlaneseq
    %v1158 = vshrl.u32 %v1157, 7
    %v1159 = vsub.s32 3, %v1158
    %v1160 = vrot.slane %v1124, %v1159
    %v1161 = vmul.f32 %v1155, %v1160
    %1162 = vset.pattern.permute.xlu0 4
    %1163 = vperm.xlu0 %1162, %v966
    %v1164 = vpop.permute.xlu0 %1163
    %v1166 = vlaneseq
    %v1167 = vshrl.u32 %v1166, 7
    %v1168 = vsub.s32 4, %v1167
    %v1169 = vrot.slane %v1124, %v1168
    %v1170 = vmul.f32 %v1164, %v1169
    %1171 = vset.pattern.permute.xlu0 5
    %1172 = vperm.xlu0 %1171, %v966
    %v1173 = vpop.permute.xlu0 %1172
    %v1175 = vlaneseq
    %v1176 = vshrl.u32 %v1175, 7
    %v1177 = vsub.s32 5, %v1176
    %v1178 = vrot.slane %v1124, %v1177
    %v1179 = vmul.f32 %v1173, %v1178
    %1180 = vset.pattern.permute.xlu0 6
    %1181 = vperm.xlu0 %1180, %v966
    %v1182 = vpop.permute.xlu0 %1181
    %v1184 = vlaneseq
    %v1185 = vshrl.u32 %v1184, 7
    %v1186 = vsub.s32 6, %v1185
    %v1187 = vrot.slane %v1124, %v1186
    %v1188 = vmul.f32 %v1182, %v1187
    %1189 = vset.pattern.permute.xlu0 7
    %1190 = vperm.xlu0 %1189, %v966
    %v1191 = vpop.permute.xlu0 %1190
    %v1193 = vlaneseq
    %v1194 = vshrl.u32 %v1193, 7
    %v1195 = vsub.s32 7, %v1194
    %v1196 = vrot.slane %v1124, %v1195
    %v1197 = vmul.f32 %v1191, %v1196
    %v1198 = vadd.f32 %v1134, %v1143
    %v1199 = vadd.f32 %v1152, %v1161
    %v1200 = vadd.f32 %v1170, %v1179
    %v1201 = vadd.f32 %v1188, %v1197
    %v1202 = vadd.f32 %v1198, %v1199
    %v1203 = vadd.f32 %v1200, %v1201
    %v1204 = vadd.f32 %v1202, %v1203
    %v1205 = vadd.f32 %v951, %v1204
    %v1206 = vlaneseq
    %v1207 = vshrl.u32 %v1206, 7
    %v1208 = vsub.s32 0, %v1207
    %v1209 = vrot.slane %v1044, %v1208
    %v1210 = vmul.f32 %v1128, %v1209
    %v1211 = vlaneseq
    %v1212 = vshrl.u32 %v1211, 7
    %v1213 = vsub.s32 1, %v1212
    %v1214 = vrot.slane %v1044, %v1213
    %v1215 = vmul.f32 %v1137, %v1214
    %v1216 = vlaneseq
    %v1217 = vshrl.u32 %v1216, 7
    %v1218 = vsub.s32 2, %v1217
    %v1219 = vrot.slane %v1044, %v1218
    %v1220 = vmul.f32 %v1146, %v1219
    %v1221 = vlaneseq
    %v1222 = vshrl.u32 %v1221, 7
    %v1223 = vsub.s32 3, %v1222
    %v1224 = vrot.slane %v1044, %v1223
    %v1225 = vmul.f32 %v1155, %v1224
    %v1226 = vlaneseq
    %v1227 = vshrl.u32 %v1226, 7
    %v1228 = vsub.s32 4, %v1227
    %v1229 = vrot.slane %v1044, %v1228
    %v1230 = vmul.f32 %v1164, %v1229
    %v1231 = vlaneseq
    %v1232 = vshrl.u32 %v1231, 7
    %v1233 = vsub.s32 5, %v1232
    %v1234 = vrot.slane %v1044, %v1233
    %v1235 = vmul.f32 %v1173, %v1234
    %v1236 = vlaneseq
    %v1237 = vshrl.u32 %v1236, 7
    %v1238 = vsub.s32 6, %v1237
    %v1239 = vrot.slane %v1044, %v1238
    %v1240 = vmul.f32 %v1182, %v1239
    %v1241 = vlaneseq
    %v1242 = vshrl.u32 %v1241, 7
    %v1243 = vsub.s32 7, %v1242
    %v1244 = vrot.slane %v1044, %v1243
    %v1245 = vmul.f32 %v1191, %v1244
    %v1246 = vadd.f32 %v1210, %v1215
    %v1247 = vadd.f32 %v1220, %v1225
    %v1248 = vadd.f32 %v1230, %v1235
    %v1249 = vadd.f32 %v1240, %v1245
    %v1250 = vadd.f32 %v1246, %v1247
    %v1251 = vadd.f32 %v1248, %v1249
    %v1252 = vadd.f32 %v1250, %v1251
    %v1253 = vlaneseq
    %v1254 = vshrl.u32 %v1253, 7
    %v1255 = vsub.s32 0, %v1254
    %v1256 = vrot.slane %v1252, %v1255
    %v1257 = vmul.f32 %v41, %v1256
    %v1258 = vlaneseq
    %v1259 = vshrl.u32 %v1258, 7
    %v1260 = vsub.s32 1, %v1259
    %v1261 = vrot.slane %v1252, %v1260
    %v1262 = vmul.f32 %v50, %v1261
    %v1263 = vlaneseq
    %v1264 = vshrl.u32 %v1263, 7
    %v1265 = vsub.s32 2, %v1264
    %v1266 = vrot.slane %v1252, %v1265
    %v1267 = vmul.f32 %v59, %v1266
    %v1268 = vlaneseq
    %v1269 = vshrl.u32 %v1268, 7
    %v1270 = vsub.s32 3, %v1269
    %v1271 = vrot.slane %v1252, %v1270
    %v1272 = vmul.f32 %v68, %v1271
    %v1273 = vlaneseq
    %v1274 = vshrl.u32 %v1273, 7
    %v1275 = vsub.s32 4, %v1274
    %v1276 = vrot.slane %v1252, %v1275
    %v1277 = vmul.f32 %v77, %v1276
    %v1278 = vlaneseq
    %v1279 = vshrl.u32 %v1278, 7
    %v1280 = vsub.s32 5, %v1279
    %v1281 = vrot.slane %v1252, %v1280
    %v1282 = vmul.f32 %v86, %v1281
    %v1283 = vlaneseq
    %v1284 = vshrl.u32 %v1283, 7
    %v1285 = vsub.s32 6, %v1284
    %v1286 = vrot.slane %v1252, %v1285
    %v1287 = vmul.f32 %v95, %v1286
    %v1288 = vlaneseq
    %v1289 = vshrl.u32 %v1288, 7
    %v1290 = vsub.s32 7, %v1289
    %v1291 = vrot.slane %v1252, %v1290
    %v1292 = vmul.f32 %v104, %v1291
    %v1293 = vadd.f32 %v1257, %v1262
    %v1294 = vadd.f32 %v1267, %v1272
    %v1295 = vadd.f32 %v1277, %v1282
    %v1296 = vadd.f32 %v1287, %v1292
    %v1297 = vadd.f32 %v1293, %v1294
    %v1298 = vadd.f32 %v1295, %v1296
    %v1299 = vadd.f32 %v1297, %v1298
    %1301 = vset.pattern.permute.xlu0 0
    %1302 = vperm.xlu0 %1301, %v1252
    %v1303 = vpop.permute.xlu0 %1302
    %v1305 = vlaneseq
    %v1306 = vshrl.u32 %v1305, 7
    %v1307 = vsub.s32 0, %v1306
    %v1308 = vrot.slane %v1299, %v1307
    %v1309 = vmul.f32 %v1303, %v1308
    %1310 = vset.pattern.permute.xlu0 1
    %1311 = vperm.xlu0 %1310, %v1252
    %v1312 = vpop.permute.xlu0 %1311
    %v1314 = vlaneseq
    %v1315 = vshrl.u32 %v1314, 7
    %v1316 = vsub.s32 1, %v1315
    %v1317 = vrot.slane %v1299, %v1316
    %v1318 = vmul.f32 %v1312, %v1317
    %1319 = vset.pattern.permute.xlu0 2
    %1320 = vperm.xlu0 %1319, %v1252
    %v1321 = vpop.permute.xlu0 %1320
    %v1323 = vlaneseq
    %v1324 = vshrl.u32 %v1323, 7
    %v1325 = vsub.s32 2, %v1324
    %v1326 = vrot.slane %v1299, %v1325
    %v1327 = vmul.f32 %v1321, %v1326
    %1328 = vset.pattern.permute.xlu0 3
    %1329 = vperm.xlu0 %1328, %v1252
    %v1330 = vpop.permute.xlu0 %1329
    %v1332 = vlaneseq
    %v1333 = vshrl.u32 %v1332, 7
    %v1334 = vsub.s32 3, %v1333
    %v1335 = vrot.slane %v1299, %v1334
    %v1336 = vmul.f32 %v1330, %v1335
    %1337 = vset.pattern.permute.xlu0 4
    %1338 = vperm.xlu0 %1337, %v1252
    %v1339 = vpop.permute.xlu0 %1338
    %v1341 = vlaneseq
    %v1342 = vshrl.u32 %v1341, 7
    %v1343 = vsub.s32 4, %v1342
    %v1344 = vrot.slane %v1299, %v1343
    %v1345 = vmul.f32 %v1339, %v1344
    %1346 = vset.pattern.permute.xlu0 5
    %1347 = vperm.xlu0 %1346, %v1252
    %v1348 = vpop.permute.xlu0 %1347
    %v1350 = vlaneseq
    %v1351 = vshrl.u32 %v1350, 7
    %v1352 = vsub.s32 5, %v1351
    %v1353 = vrot.slane %v1299, %v1352
    %v1354 = vmul.f32 %v1348, %v1353
    %1355 = vset.pattern.permute.xlu0 6
    %1356 = vperm.xlu0 %1355, %v1252
    %v1357 = vpop.permute.xlu0 %1356
    %v1359 = vlaneseq
    %v1360 = vshrl.u32 %v1359, 7
    %v1361 = vsub.s32 6, %v1360
    %v1362 = vrot.slane %v1299, %v1361
    %v1363 = vmul.f32 %v1357, %v1362
    %1364 = vset.pattern.permute.xlu0 7
    %1365 = vperm.xlu0 %1364, %v1252
    %v1366 = vpop.permute.xlu0 %1365
    %v1368 = vlaneseq
    %v1369 = vshrl.u32 %v1368, 7
    %v1370 = vsub.s32 7, %v1369
    %v1371 = vrot.slane %v1299, %v1370
    %v1372 = vmul.f32 %v1366, %v1371
    %v1373 = vadd.f32 %v1309, %v1318
    %v1374 = vadd.f32 %v1327, %v1336
    %v1375 = vadd.f32 %v1345, %v1354
    %v1376 = vadd.f32 %v1363, %v1372
    %v1377 = vadd.f32 %v1373, %v1374
    %v1378 = vadd.f32 %v1375, %v1376
    %v1379 = vadd.f32 %v1377, %v1378
    %v1380 = vadd.f32 %v1205, %v1379
    %v1381 = vadd.f32 %v1380, %v36
    %vm1382 = vcmask 64512
    %1383 = vst.msk [vmem:[#allocation7] sm:$0xff] %vm1382, %v1381
    // Predicated region
    $region18: #{model_forward.1} parent=1 // pred_check
      _
    $region19: #{model_forward.1} parent=1 // pred_check_branch
      %1385 = sbr.rel (0) target = $region21
    $region20: #{model_forward.1} parent=1 // pred_region
      %s1387 = ssub.s32 128, 128
      %1388 = vsyncadd [#allocation4], %s1387
      %s1390 = sshll.u32 [#allocation7], 4
      %s1391 = int_to_ptr.vmem [resolvable:$true] %s1390
      %1393 = dma.vmem_to_hbm [thread:$0]  %s1391, 128, %s2, [#allocation4]
    $region21: #{model_forward.1} parent=1 // pred_fallthru
      _
    // Predicated region
    $region22: #{model_forward.1} parent=1 // pred_check
      _
    $region23: #{model_forward.1} parent=1 // pred_check_branch
      %1395 = sbr.rel (0) target = $region25
    $region24: #{model_forward.1} parent=1 // pred_region
      %1396 = dma.done [#allocation4], 128
    $region25: #{model_forward.1} parent=1 // pred_fallthru
      _
    %1397 = vsyncpa [#allocation3], 1
    %1398 = vsyncpa [#allocation6], 1
    %1399 = vsyncpa [#allocation4], 1

</llo_original>
